<compile_context>
chip_gen: v6e
topology: v6e:2x2x1
jax: 0.10.0
libtpu: 0.0.40
codegen_flags: <defaults>
</compile_context>

<pallas_src>
import functools

import jax
import jax.numpy as jnp
from jax.experimental import pallas as pl
from jax.experimental.pallas import tpu as pltpu


def _round_up(x, m):
    return (x + m - 1) // m * m


def _mha_kernel(num_heads, head_size, x_ref, wqkv_ref, wp_ref, bp_ref, o_ref):
    """One batch row per grid step; heads fused; QKV / proj each a single matmul.

    x_ref    : (1, T, C)    bf16  activations for this batch row
    wqkv_ref : (C, Gp)      bf16  [Q|K|V] head-concat weights, Q pre-scaled by
                                  hs**-0.5, lane-padded Gp = round_up(3*H*hs, 128)
    wp_ref   : (H*hs, Cp)   bf16  proj.weight^T, lane-padded Cp = round_up(C, 128)
    bp_ref   : (1, Cp)      f32   proj.bias (lane-padded)
    o_ref    : (1, T, Cp)   f32   lane-dense output slab
    """
    H, hs = num_heads, head_size
    G = 3 * H * hs
    T = x_ref.shape[1]

    x = x_ref[0]                                                # (T, C) bf16

    # --- fused QKV projection: ONE lane-dense MXU matmul ---------------------
    qkv = jnp.dot(x, wqkv_ref[...],
                  preferred_element_type=jnp.float32)           # (T, Gp) f32
    qkv = qkv[:, :G].astype(jnp.bfloat16)                       # strip pad cols
    qkv = jnp.transpose(qkv.reshape(T, 3 * H, hs), (1, 0, 2))   # (3H, T, hs)
    q = qkv[:H]              # (H, T, hs) — scale hs**-0.5 already folded in
    k = qkv[H:2 * H]         # (H, T, hs)
    v = qkv[2 * H:]          # (H, T, hs)

    # --- attention scores, all heads batched ---------------------------------
    s = jnp.einsum('hqd,hkd->hqk', q, k,
                   preferred_element_type=jnp.float32)          # (H, T, T) f32

    # causal mask: tril(ones(T,T)) == 0 -> -inf (matches masked_fill)
    row = jax.lax.broadcasted_iota(jnp.int32, (T, T), 0)
    col = jax.lax.broadcasted_iota(jnp.int32, (T, T), 1)
    s = jnp.where((row >= col)[None], s, -jnp.inf)

    # --- softmax in f32; reciprocal on the (otherwise idle) EUP --------------
    m = jnp.max(s, axis=-1, keepdims=True)                      # (H, T, 1)
    p = jnp.exp(s - m)
    l = jnp.sum(p, axis=-1, keepdims=True)
    p = p * pl.reciprocal(l, approx=True)                       # (H, T, T)
    # attention dropout(p=0.0) is identity — omitted.

    # --- attention-weighted values, batched over heads -----------------------
    o = jnp.einsum('hqk,hkd->hqd', p.astype(jnp.bfloat16), v,
                   preferred_element_type=jnp.float32)          # (H, T, hs)

    # --- output projection: concat heads + ONE (T,H*hs)@(H*hs,Cp) matmul -----
    o_cat = jnp.transpose(o, (1, 0, 2)).reshape(T, H * hs).astype(jnp.bfloat16)
    out = jnp.dot(o_cat, wp_ref[...],
                  preferred_element_type=jnp.float32) + bp_ref[...]  # (T, Cp)
    o_ref[0] = out.astype(o_ref.dtype)
    # final dropout(p=0.0) is identity — omitted.


def pack_params(wq, wk, wv, wp_t, bp):
    """One-time parameter preprocessing (hoisted out of the per-call hot path).

    wq/wk/wv: (H, C, hs).  wp_t: (H, hs, C).  bp: (C,).
    Returns (wqkv, wp, bp) packed, lane-padded, bf16/f32.
    """
    H, C, hs = wq.shape
    G = 3 * H * hs
    Gp = _round_up(G, 128)
    Cp = _round_up(C, 128)
    scale = hs ** -0.5

    # per-head weights -> (C, H*hs) head-concat layout; fold softmax scale into Q.
    wq2 = jnp.transpose(wq, (1, 0, 2)).reshape(C, H * hs) * scale
    wk2 = jnp.transpose(wk, (1, 0, 2)).reshape(C, H * hs)
    wv2 = jnp.transpose(wv, (1, 0, 2)).reshape(C, H * hs)
    wqkv = jnp.concatenate([wq2, wk2, wv2], axis=1)                    # (C, G)
    wqkv = jnp.pad(wqkv, ((0, 0), (0, Gp - G))).astype(jnp.bfloat16)   # (C, Gp)

    wp = jnp.pad(wp_t.reshape(H * hs, C),
                 ((0, 0), (0, Cp - C))).astype(jnp.bfloat16)           # (H*hs, Cp)
    bpp = jnp.pad(bp, (0, Cp - C)).reshape(1, Cp).astype(jnp.float32)  # (1, Cp)
    return wqkv, wp, bpp


def multi_head_masked_attention(x, packed, num_heads, head_size):
    """x: (B, T, C) f32.  packed: output of pack_params."""
    wqkv, wp, bpp = packed
    B, T, C = x.shape
    H, hs = num_heads, head_size
    Gp = wqkv.shape[1]
    Cp = wp.shape[1]

    flops = (2 * B * T * C * (3 * H * hs)      # fused QKV projection
             + 4 * B * H * T * T * hs          # scores + P@V
             + 2 * B * T * (H * hs) * C)       # output projection
    bytes_accessed = (x.size * 2 + wqkv.size * 2 + wp.size * 2
                      + bpp.size * 4 + B * T * Cp * 4)
    cost = pl.CostEstimate(flops=flops,
                           transcendentals=B * H * T * T,
                           bytes_accessed=bytes_accessed)

    kernel = functools.partial(_mha_kernel, H, hs)

    out_p = pl.pallas_call(
        kernel,
        out_shape=jax.ShapeDtypeStruct((B, T, Cp), jnp.float32),
        grid=(B,),
        in_specs=[
            pl.BlockSpec((1, T, C), lambda b: (b, 0, 0)),       # x: one batch row
            pl.BlockSpec((C, Gp), lambda b: (0, 0)),            # fused QKV weights
            pl.BlockSpec((H * hs, Cp), lambda b: (0, 0)),       # proj weight^T
            pl.BlockSpec((1, Cp), lambda b: (0, 0)),            # proj bias
        ],
        out_specs=pl.BlockSpec((1, T, Cp), lambda b: (b, 0, 0)),
        compiler_params=pltpu.CompilerParams(
            dimension_semantics=("parallel",)),
        cost_estimate=cost,
    )(x.astype(jnp.bfloat16), wqkv, wp, bpp)

    return out_p[:, :, :C]


def reference(x, wq, wk, wv, wp_t, bp):
    """Pure-JAX f32 reference mirroring the PyTorch forward (mask=None, dropout=0)."""
    B, T, C = x.shape
    H, _, hs = wq.shape
    scale = hs ** -0.5
    causal = jnp.tril(jnp.ones((T, T), jnp.float32)) != 0
    outs = []
    for h in range(H):
        q = x @ wq[h]
        k = x @ wk[h]
        v = x @ wv[h]
        s = (q @ jnp.swapaxes(k, -1, -2)) * scale
        s = jnp.where(causal, s, -jnp.inf)
        p = jax.nn.softmax(s, axis=-1)
        outs.append(p @ v)
    cat = jnp.concatenate(outs, axis=-1)                        # (B, T, H*hs)
    wp_full = wp_t.reshape(H * hs, C)
    return cat @ wp_full + bp


if __name__ == "__main__":
    # Small shapes consistent with the module.
    num_heads, head_size, block_size, n_embd = 4, 8, 16, 32
    B, T = 2, block_size

    key = jax.random.PRNGKey(0)
    kx, kq, kk, kv, kp, kb = jax.random.split(key, 6)

    x = jax.random.normal(kx, (B, T, n_embd), jnp.float32)

    # Synthetic parameters (shapes from nn.Linear in __init__), pre-transposed
    # for x @ W:
    #   key/query/value: Linear(n_embd, head_size, bias=False) per head
    #   proj:            Linear(head_size*num_heads, n_embd)
    wq = 0.1 * jax.random.normal(kq, (num_heads, n_embd, head_size), jnp.float32)
    wk = 0.1 * jax.random.normal(kk, (num_heads, n_embd, head_size), jnp.float32)
    wv = 0.1 * jax.random.normal(kv, (num_heads, n_embd, head_size), jnp.float32)
    wp_t = 0.1 * jax.random.normal(kp, (num_heads, head_size, n_embd), jnp.float32)
    bp = 0.1 * jax.random.normal(kb, (n_embd,), jnp.float32)

    # One-time parameter packing (hoisted out of the per-call hot path).
    packed = jax.tree.map(jax.block_until_ready, pack_params(wq, wk, wv, wp_t, bp))

    out = multi_head_masked_attention(x, packed, num_heads, head_size)
    out = jax.block_until_ready(out)

    ref = reference(x, wq, wk, wv, wp_t, bp)
    assert out.shape == (B, T, n_embd)
    # bf16 matmul inputs (f32 accumulation) + approx reciprocal -> loosened tol.
    assert jnp.allclose(out, ref, atol=6e-2, rtol=6e-2), (
        float(jnp.max(jnp.abs(out - ref))))

    print("KERNEL_OK")
</pallas_src>

<mosaic_0001>
module attributes {stable_mosaic.version = 11 : i64} {
  func.func @_mha_kernel(%arg0: i32, %arg1: memref<1x16x32xbf16, #tpu.memory_space<vmem>>, %arg2: memref<32x128xbf16, #tpu.memory_space<vmem>>, %arg3: memref<32x128xbf16, #tpu.memory_space<vmem>>, %arg4: memref<1x128xf32, #tpu.memory_space<vmem>>, %arg5: memref<1x16x128xf32, #tpu.memory_space<vmem>>) attributes {dimension_semantics = [#tpu.dimension_semantics<parallel>], iteration_bounds = array<i64: 2>, scalar_prefetch = 0 : i64, scratch_operands = 0 : i64, tpu.core_type = #tpu.core_type<tc>, window_params = [{transform_indices = @transform_0, window_bounds = array<i64: 1, 16, 32>}, {pipeline_mode = #tpu.pipeline_mode<synchronous>, transform_indices = @transform_1, window_bounds = array<i64: 32, 128>}, {pipeline_mode = #tpu.pipeline_mode<synchronous>, transform_indices = @transform_2, window_bounds = array<i64: 32, 128>}, {pipeline_mode = #tpu.pipeline_mode<synchronous>, transform_indices = @transform_3, window_bounds = array<i64: 1, 128>}, {transform_indices = @transform_4, window_bounds = array<i64: 1, 16, 128>}]} {
    %c0 = arith.constant 0 : index
    %c0_0 = arith.constant 0 : index
    %c0_1 = arith.constant 0 : index
    %0 = vector.load %arg1[%c0, %c0_0, %c0_1] : memref<1x16x32xbf16, #tpu.memory_space<vmem>>, vector<1x16x32xbf16>
    %1 = vector.shape_cast %0 : vector<1x16x32xbf16> to vector<16x32xbf16>
    %c0_2 = arith.constant 0 : index
    %c0_3 = arith.constant 0 : index
    %2 = vector.load %arg2[%c0_2, %c0_3] : memref<32x128xbf16, #tpu.memory_space<vmem>>, vector<32x128xbf16>
    %cst = arith.constant dense<0.000000e+00> : vector<16x128xf32>
    %3 = tpu.matmul %1, %2, %cst {dimension_numbers = #tpu.dot_dimension_numbers<[1], [0], [0], [1], [0, 0, 1, 1], [], []>} : vector<16x32xbf16>, vector<32x128xbf16>, vector<16x128xf32> -> vector<16x128xf32>
    %4 = vector.extract_strided_slice %3 {offsets = [0, 0], sizes = [16, 96], strides = [1, 1]} : vector<16x128xf32> to vector<16x96xf32>
    %5 = arith.truncf %4 : vector<16x96xf32> to vector<16x96xbf16>
    %6 = vector.shape_cast %5 : vector<16x96xbf16> to vector<16x12x8xbf16>
    %7 = tpu.transpose %6, [1, 0, 2] : vector<16x12x8xbf16> -> vector<12x16x8xbf16>
    %8 = vector.extract_strided_slice %7 {offsets = [0, 0, 0], sizes = [4, 16, 8], strides = [1, 1, 1]} : vector<12x16x8xbf16> to vector<4x16x8xbf16>
    %9 = vector.extract_strided_slice %7 {offsets = [4, 0, 0], sizes = [4, 16, 8], strides = [1, 1, 1]} : vector<12x16x8xbf16> to vector<4x16x8xbf16>
    %10 = vector.extract_strided_slice %7 {offsets = [8, 0, 0], sizes = [4, 16, 8], strides = [1, 1, 1]} : vector<12x16x8xbf16> to vector<4x16x8xbf16>
    "tpu.trace_start"() <{level = 10 : i32, message = "hqd,hkd->hqk"}> : () -> ()
    %cst_4 = arith.constant dense<0.000000e+00> : vector<4x16x16xf32>
    %11 = tpu.matmul %8, %9, %cst_4 {dimension_numbers = #tpu.dot_dimension_numbers<[2], [2], [1], [1], [0, 0, 0, 1, 1, 1], [0], [0]>} : vector<4x16x8xbf16>, vector<4x16x8xbf16>, vector<4x16x16xf32> -> vector<4x16x16xf32>
    "tpu.trace_stop"() : () -> ()
    %12 = tpu.iota {dimensions = array<i32: 0>} : vector<16x16xi32>
    %13 = tpu.iota {dimensions = array<i32: 1>} : vector<16x16xi32>
    %14 = arith.cmpi sge, %12, %13 : vector<16x16xi32>
    %15 = vector.shape_cast %14 : vector<16x16xi1> to vector<1x16x16xi1>
    %cst_5 = arith.constant 0xFF800000 : f32
    %16 = vector.shape_cast %15 : vector<1x16x16xi1> to vector<1x16x16xi1>
    %17 = vector.broadcast %16 : vector<1x16x16xi1> to vector<4x16x16xi1>
    %18 = vector.broadcast %cst_5 : f32 to vector<4x16x16xf32>
    %19 = arith.select %17, %11, %18 : vector<4x16x16xi1>, vector<4x16x16xf32>
    %cst_6 = arith.constant dense<0xFF800000> : vector<4x16xf32>
    %20 = vector.multi_reduction <maximumf>, %19, %cst_6 [2] : vector<4x16x16xf32> to vector<4x16xf32>
    %21 = vector.shape_cast %20 : vector<4x16xf32> to vector<4x16x1xf32>
    %22 = vector.broadcast %21 : vector<4x16x1xf32> to vector<4x16x16xf32>
    %23 = arith.subf %19, %22 : vector<4x16x16xf32>
    %24 = math.exp %23 : vector<4x16x16xf32>
    %cst_7 = arith.constant dense<0.000000e+00> : vector<4x16xf32>
    %25 = vector.multi_reduction <add>, %24, %cst_7 [2] : vector<4x16x16xf32> to vector<4x16xf32>
    %26 = vector.shape_cast %25 : vector<4x16xf32> to vector<4x16x1xf32>
    %27 = tpu.reciprocal %26 {approx = true} : vector<4x16x1xf32> -> vector<4x16x1xf32>
    %28 = vector.broadcast %27 : vector<4x16x1xf32> to vector<4x16x16xf32>
    %29 = arith.mulf %24, %28 : vector<4x16x16xf32>
    %30 = arith.truncf %29 : vector<4x16x16xf32> to vector<4x16x16xbf16>
    "tpu.trace_start"() <{level = 10 : i32, message = "hqk,hkd->hqd"}> : () -> ()
    %cst_8 = arith.constant dense<0.000000e+00> : vector<4x16x8xf32>
    %31 = tpu.matmul %30, %10, %cst_8 {dimension_numbers = #tpu.dot_dimension_numbers<[2], [1], [1], [2], [0, 0, 0, 1, 1, 2], [0], [0]>} : vector<4x16x16xbf16>, vector<4x16x8xbf16>, vector<4x16x8xf32> -> vector<4x16x8xf32>
    "tpu.trace_stop"() : () -> ()
    %32 = tpu.transpose %31, [1, 0, 2] : vector<4x16x8xf32> -> vector<16x4x8xf32>
    %33 = vector.shape_cast %32 : vector<16x4x8xf32> to vector<16x32xf32>
    %34 = arith.truncf %33 : vector<16x32xf32> to vector<16x32xbf16>
    %c0_9 = arith.constant 0 : index
    %c0_10 = arith.constant 0 : index
    %35 = vector.load %arg3[%c0_9, %c0_10] : memref<32x128xbf16, #tpu.memory_space<vmem>>, vector<32x128xbf16>
    %cst_11 = arith.constant dense<0.000000e+00> : vector<16x128xf32>
    %36 = tpu.matmul %34, %35, %cst_11 {dimension_numbers = #tpu.dot_dimension_numbers<[1], [0], [0], [1], [0, 0, 1, 1], [], []>} : vector<16x32xbf16>, vector<32x128xbf16>, vector<16x128xf32> -> vector<16x128xf32>
    %c0_12 = arith.constant 0 : index
    %c0_13 = arith.constant 0 : index
    %37 = vector.load %arg4[%c0_12, %c0_13] : memref<1x128xf32, #tpu.memory_space<vmem>>, vector<1x128xf32>
    %38 = vector.broadcast %37 : vector<1x128xf32> to vector<16x128xf32>
    %39 = arith.addf %36, %38 : vector<16x128xf32>
    %c0_14 = arith.constant 0 : index
    %c0_15 = arith.constant 0 : index
    %c0_16 = arith.constant 0 : index
    %40 = vector.load %arg5[%c0_14, %c0_15, %c0_16] : memref<1x16x128xf32, #tpu.memory_space<vmem>>, vector<1x16x128xf32>
    %41 = vector.shape_cast %40 : vector<1x16x128xf32> to vector<16x128xf32>
    %42 = vector.shape_cast %39 : vector<16x128xf32> to vector<1x16x128xf32>
    tpu.vector_store %arg5[%c0_14, %c0_15, %c0_16], %42 {strides = array<i32>} : memref<1x16x128xf32, #tpu.memory_space<vmem>>, vector<1x16x128xf32>,
    return
  }
  func.func @transform_0(%arg0: i32) -> (i32, i32, i32) {
    %c0_i32 = arith.constant 0 : i32
    %c0_i32_0 = arith.constant 0 : i32
    %c0_i32_1 = arith.constant 0 : i32
    return %arg0, %c0_i32, %c0_i32_0 : i32, i32, i32
  }
  func.func @transform_1(%arg0: i32) -> (i32, i32) {
    %c0_i32 = arith.constant 0 : i32
    %c0_i32_0 = arith.constant 0 : i32
    %c0_i32_1 = arith.constant 0 : i32
    return %c0_i32, %c0_i32_0 : i32, i32
  }
  func.func @transform_2(%arg0: i32) -> (i32, i32) {
    %c0_i32 = arith.constant 0 : i32
    %c0_i32_0 = arith.constant 0 : i32
    %c0_i32_1 = arith.constant 0 : i32
    return %c0_i32, %c0_i32_0 : i32, i32
  }
  func.func @transform_3(%arg0: i32) -> (i32, i32) {
    %c0_i32 = arith.constant 0 : i32
    %c0_i32_0 = arith.constant 0 : i32
    %c0_i32_1 = arith.constant 0 : i32
    return %c0_i32, %c0_i32_0 : i32, i32
  }
  func.func @transform_4(%arg0: i32) -> (i32, i32, i32) {
    %c0_i32 = arith.constant 0 : i32
    %c0_i32_0 = arith.constant 0 : i32
    %c0_i32_1 = arith.constant 0 : i32
    return %arg0, %c0_i32, %c0_i32_0 : i32, i32, i32
  }
}

</mosaic_0001>

<llo_original>
// kernel: tpu_custom_call.1
$region0: #{tpu_custom_call.1}
  #allocation0 [shape = 'u32[]', space=smem, size = 0x4, offset = 0x4, fixed_abs, tag = 'smem constant byte address 0x4 - core index']
  #allocation1 [shape = 'u32[144,128]{1,0:T(1,128)}', space=vmem, size = 0x12000, scoped, tag = 'internal scratch']
  %s0 = inlined_call_operand.hbm [shape: bf16[2,16,32], index: 0, kind: input, shape index: {}]
  %s1 = inlined_call_operand.hbm [shape: bf16[32,128], index: 1, kind: input, shape index: {}]
  %s2 = inlined_call_operand.hbm [shape: bf16[32,128], index: 2, kind: input, shape index: {}]
  %s3 = inlined_call_operand.vmem [shape: f32[1,128], index: 3, kind: input, shape index: {}]
  %s4 = inlined_call_operand.hbm [shape: f32[2,16,128], index: 4, kind: output, shape index: {}]
  %s5 = sld [smem:[#allocation0]]
  $region61: #{tpu_custom_call.1} parent=0
    _
  %s7 = ssub.s32 1, %s5
  %s8 = scalar_select 0, %s7, %s5
  $region1: #{tpu_custom_call.1} parent=0
    #allocation2 [shape = 'u8[8192]{0}', space=vmem, size = 0x2000, scoped, tag = 'input window, operand 0']
    #allocation3 [shape = 's32[2]{0}', space=sflag, size = 0x8, scoped, tag = 'scoped memory for tpu_custom_call.1']
    #allocation4 [shape = 's32[2]{0}', space=sflag, size = 0x8, scoped, tag = 'scoped memory for tpu_custom_call.1']
    #allocation5 [shape = 'u8[8192]{0}', space=vmem, size = 0x2000, scoped, tag = 'input window, operand 1, single buffered']
    #allocation6 [shape = 's32[1]{0}', space=sflag, size = 0x4, scoped, tag = 'scoped memory for tpu_custom_call.1']
    #allocation7 [shape = 'u8[8192]{0}', space=vmem, size = 0x2000, scoped, tag = 'input window, operand 2, single buffered']
    #allocation8 [shape = 'u8[16384]{0}', space=vmem, size = 0x4000, scoped, tag = 'output window, operand 0']
    %9 = vsyncpa [#allocation3], 0
    %s10 = scalar_lea.sflag [#allocation3], 1
    %11 = vsyncpa %s10, 0
    %12 = vsyncpa [#allocation6], 0
    %13 = vsyncpa [#allocation4], 0
    %s14 = scalar_lea.sflag [#allocation4], 1
    %15 = vsyncpa %s14, 0
    loop: start=0, step=1, limit=4
    $region2: #{tpu_custom_call.1} parent=1 // loop_pre_header
      _
    $region3: #{tpu_custom_call.1} parent=1 // loop_header
      %s17 = sphi 0, %s21
      %p18 = scmp.ge.s32.totalorder %s17, 4
      %s27 = sphi 0, %s29
      %s30 = sphi 0, %s27
      %s31 = sphi 0, %s30
      %s47 = sphi 0, %s31
      %s51 = sphi 0, %s51
      %s53 = sphi 0, %s51
      %s54 = sphi 0, %s53
      %s68 = sphi 0, %s54
      %s72 = sphi 0, %s72
      %s74 = sphi 0, %s72
      %s75 = sphi 0, %s74
      %s89 = sphi 0, %s75
      %s93 = sphi 0, %s93
      %s95 = sphi 0, %s93
      %s96 = sphi 0, %s95
      %s110 = sphi 0, %s96
      %s116 = sphi 0, %s118
      %s119 = sphi 0, %s116
      %s120 = sphi 0, %s119
      %s136 = sphi 0, %s120
    $region4: #{tpu_custom_call.1} parent=1 // loop_header_branch
      %20 = sbr.rel (%p18) target = $region8
    $region5: #{tpu_custom_call.1} parent=1 // loop_body
      %s22 = ssub.s32 %s17, 1
      %s23 = ssub.s32 %s17, 2
      %s24 = sadd.s32 %s17, 1
      %s25 = ssub.s32 %s17, %s24
      %p26 = scmp.eq.s32.totalorder %s25, 0
      %s28 = sadd.s32 %s27, 1
      %s29 = scalar_select %p26, %s27, %s28
      %p32 = pneg %p26
      %p33 = scmp.eq.s32.totalorder %s17, 1
      %p34 = por %p32, %p33
      %p35 = scmp.ne.s32.totalorder %s27, %s30
      %p36 = scmp.eq.s32.totalorder %s17, 0
      %p37 = por %p35, %p36
      %p38 = scmp.ne.s32.totalorder %s27, %s30
      %p39 = scmp.eq.s32.totalorder %s22, 1
      %p40 = por %p38, %p39
      %p41 = scmp.ne.s32.totalorder %s30, %s31
      %p42 = scmp.eq.s32.totalorder %s22, 0
      %p43 = por %p41, %p42
      %p44 = scmp.ne.s32.totalorder %s30, %s31
      %p45 = scmp.eq.s32.totalorder %s23, 1
      %p46 = por %p44, %p45
      %p48 = scmp.ne.s32.totalorder %s31, %s47
      %p49 = scmp.eq.s32.totalorder %s23, 0
      %p50 = por %p48, %p49
      %s52 = sadd.s32 %s51, 1
      %p55 = scmp.eq.s32.totalorder %s17, 1
      %p56 = scmp.ne.s32.totalorder %s51, %s53
      %p57 = scmp.eq.s32.totalorder %s17, 0
      %p58 = por %p56, %p57
      %p59 = scmp.ne.s32.totalorder %s51, %s53
      %p60 = scmp.eq.s32.totalorder %s22, 1
      %p61 = por %p59, %p60
      %p62 = scmp.ne.s32.totalorder %s53, %s54
      %p63 = scmp.eq.s32.totalorder %s22, 0
      %p64 = por %p62, %p63
      %p65 = scmp.ne.s32.totalorder %s53, %s54
      %p66 = scmp.eq.s32.totalorder %s23, 1
      %p67 = por %p65, %p66
      %p69 = scmp.ne.s32.totalorder %s54, %s68
      %p70 = scmp.eq.s32.totalorder %s23, 0
      %p71 = por %p69, %p70
      %s73 = sadd.s32 %s72, 1
      %p76 = scmp.eq.s32.totalorder %s17, 1
      %p77 = scmp.ne.s32.totalorder %s72, %s74
      %p78 = scmp.eq.s32.totalorder %s17, 0
      %p79 = por %p77, %p78
      %p80 = scmp.ne.s32.totalorder %s72, %s74
      %p81 = scmp.eq.s32.totalorder %s22, 1
      %p82 = por %p80, %p81
      %p83 = scmp.ne.s32.totalorder %s74, %s75
      %p84 = scmp.eq.s32.totalorder %s22, 0
      %p85 = por %p83, %p84
      %p86 = scmp.ne.s32.totalorder %s74, %s75
      %p87 = scmp.eq.s32.totalorder %s23, 1
      %p88 = por %p86, %p87
      %p90 = scmp.ne.s32.totalorder %s75, %s89
      %p91 = scmp.eq.s32.totalorder %s23, 0
      %p92 = por %p90, %p91
      %s94 = sadd.s32 %s93, 1
      %p97 = scmp.eq.s32.totalorder %s17, 1
      %p98 = scmp.ne.s32.totalorder %s93, %s95
      %p99 = scmp.eq.s32.totalorder %s17, 0
      %p100 = por %p98, %p99
      %p101 = scmp.ne.s32.totalorder %s93, %s95
      %p102 = scmp.eq.s32.totalorder %s22, 1
      %p103 = por %p101, %p102
      %p104 = scmp.ne.s32.totalorder %s95, %s96
      %p105 = scmp.eq.s32.totalorder %s22, 0
      %p106 = por %p104, %p105
      %p107 = scmp.ne.s32.totalorder %s95, %s96
      %p108 = scmp.eq.s32.totalorder %s23, 1
      %p109 = por %p107, %p108
      %p111 = scmp.ne.s32.totalorder %s96, %s110
      %p112 = scmp.eq.s32.totalorder %s23, 0
      %p113 = por %p111, %p112
      %s114 = ssub.s32 %s17, %s24
      %p115 = scmp.eq.s32.totalorder %s114, 0
      %s117 = sadd.s32 %s116, 1
      %s118 = scalar_select %p115, %s116, %s117
      %p121 = pneg %p115
      %p122 = scmp.eq.s32.totalorder %s17, 1
      %p123 = por %p121, %p122
      %p124 = scmp.ne.s32.totalorder %s116, %s119
      %p125 = scmp.eq.s32.totalorder %s17, 0
      %p126 = por %p124, %p125
      %p127 = scmp.ne.s32.totalorder %s116, %s119
      %p128 = scmp.eq.s32.totalorder %s22, 1
      %p129 = por %p127, %p128
      %p130 = scmp.ne.s32.totalorder %s119, %s120
      %p131 = scmp.eq.s32.totalorder %s22, 0
      %p132 = por %p130, %p131
      %p133 = scmp.ne.s32.totalorder %s119, %s120
      %p134 = scmp.eq.s32.totalorder %s23, 1
      %p135 = por %p133, %p134
      %p137 = scmp.ne.s32.totalorder %s120, %s136
      %p138 = scmp.eq.s32.totalorder %s23, 0
      %p139 = por %p137, %p138
      %p140 = scmp.le.s32.totalorder 1, %s17
      %p141 = scmp.lt.s32.totalorder %s17, 3
      %p142 = pnand %p140, %p141
      %p143 = pneg %p142
      // Predicated region
      $region9: #{tpu_custom_call.1} parent=5 // pred_check
        _
      $region10: #{tpu_custom_call.1} parent=5 // pred_check_branch
        %145 = sbr.rel (%p142) target = $region12
      $region11: #{tpu_custom_call.1} parent=5 // pred_region
        %s146 = ssub.s32 %s17, 1
        // Predicated region
        $region13: #{tpu_custom_call.1} parent=11 // pred_check
          %p147 = pneg %p64
        $region14: #{tpu_custom_call.1} parent=11 // pred_check_branch
          %149 = sbr.rel (%p147) target = $region16
        $region15: #{tpu_custom_call.1} parent=11 // pred_region
          %s151 = ssub.s32 256, 256
          %152 = vsyncadd [#allocation6], %s151
          %s153 = sshll.u32 [#allocation5], 4
          %s154 = int_to_ptr.vmem [resolvable:$true] %s153
          %159 = dma.hbm_to_vmem [thread:$0]  %s1, 256, %s154, [#allocation6], 64, 64, 4
        $region16: #{tpu_custom_call.1} parent=11 // pred_fallthru
          _
        // Predicated region
        $region17: #{tpu_custom_call.1} parent=11 // pred_check
          %p160 = pneg %p85
        $region18: #{tpu_custom_call.1} parent=11 // pred_check_branch
          %162 = sbr.rel (%p160) target = $region20
        $region19: #{tpu_custom_call.1} parent=11 // pred_region
          %s164 = ssub.s32 256, 256
          %165 = vsyncadd [#allocation6], %s164
          %s166 = sshll.u32 [#allocation7], 4
          %s167 = int_to_ptr.vmem [resolvable:$true] %s166
          %172 = dma.hbm_to_vmem [thread:$0]  %s2, 256, %s167, [#allocation6], 64, 64, 4
        $region20: #{tpu_custom_call.1} parent=11 // pred_fallthru
          _
        // Predicated region
        $region21: #{tpu_custom_call.1} parent=11 // pred_check
          %p173 = pneg %p106
        $region22: #{tpu_custom_call.1} parent=11 // pred_check_branch
          %175 = sbr.rel (%p173) target = $region24
        $region23: #{tpu_custom_call.1} parent=11 // pred_region
          _
        $region24: #{tpu_custom_call.1} parent=11 // pred_fallthru
          _
      $region12: #{tpu_custom_call.1} parent=5 // pred_fallthru
        _
      %p176 = scmp.lt.s32.totalorder %s17, 2
      // Predicated region
      $region25: #{tpu_custom_call.1} parent=5 // pred_check
        %p177 = pneg %p176
      $region26: #{tpu_custom_call.1} parent=5 // pred_check_branch
        %179 = sbr.rel (%p177) target = $region28
      $region27: #{tpu_custom_call.1} parent=5 // pred_region
        // Predicated region
        $region29: #{tpu_custom_call.1} parent=27 // pred_check
          %p180 = pneg %p37
        $region30: #{tpu_custom_call.1} parent=27 // pred_check_branch
          %182 = sbr.rel (%p180) target = $region32
        $region31: #{tpu_custom_call.1} parent=27 // pred_region
          %s183 = sand.u32 %s27, 1
          %s184 = scalar_lea.sflag [#allocation3], %s183
          %s185 = sand.u32 %s27, 1
          %s186 = smul.addr %s185, 8
          %s187 = scalar_lea.vmem [#allocation2], %s186
          %s189 = ssub.s32 128, 128
          %190 = vsyncadd %s184, %s189
          %s191 = smul.addr %s17, 2
          %s192 = smul.addr %s191, 64
          %s193 = scalar_lea.hbm %s0, %s192
          %s194 = sshll.u32 %s187, 4
          %s195 = int_to_ptr.vmem [resolvable:$true] %s194
          %200 = dma.hbm_to_vmem [thread:$0]  %s193, 128, %s195, %s184, 64, 64, 4
        $region32: #{tpu_custom_call.1} parent=27 // pred_fallthru
          _
      $region28: #{tpu_custom_call.1} parent=5 // pred_fallthru
        _
      %p201 = scmp.le.s32.totalorder 1, %s17
      %p202 = scmp.lt.s32.totalorder %s17, 3
      %p203 = pnand %p201, %p202
      %p204 = pneg %p203
      // Predicated region
      $region33: #{tpu_custom_call.1} parent=5 // pred_check
        _
      $region34: #{tpu_custom_call.1} parent=5 // pred_check_branch
        %206 = sbr.rel (%p203) target = $region36
      $region35: #{tpu_custom_call.1} parent=5 // pred_region
        %s207 = ssub.s32 %s17, 1
        %s208 = sand.u32 %s30, 1
        %s209 = scalar_lea.sflag [#allocation3], %s208
        %s210 = sand.u32 %s30, 1
        %s211 = smul.addr %s210, 8
        %s212 = scalar_lea.vmem [#allocation2], %s211
        // Predicated region
        $region37: #{tpu_custom_call.1} parent=35 // pred_check
          %p213 = pneg %p43
        $region38: #{tpu_custom_call.1} parent=35 // pred_check_branch
          %215 = sbr.rel (%p213) target = $region40
        $region39: #{tpu_custom_call.1} parent=35 // pred_region
          %216 = dma.done %s209, 128
        $region40: #{tpu_custom_call.1} parent=35 // pred_fallthru
          _
        // Predicated region
        $region41: #{tpu_custom_call.1} parent=35 // pred_check
          %p217 = pneg %p64
        $region42: #{tpu_custom_call.1} parent=35 // pred_check_branch
          %219 = sbr.rel (%p217) target = $region44
        $region43: #{tpu_custom_call.1} parent=35 // pred_region
          %220 = dma.done [#allocation6], 256
        $region44: #{tpu_custom_call.1} parent=35 // pred_fallthru
          _
        // Predicated region
        $region45: #{tpu_custom_call.1} parent=35 // pred_check
          %p221 = pneg %p85
        $region46: #{tpu_custom_call.1} parent=35 // pred_check_branch
          %223 = sbr.rel (%p221) target = $region48
        $region47: #{tpu_custom_call.1} parent=35 // pred_region
          %224 = dma.done [#allocation6], 256
        $region48: #{tpu_custom_call.1} parent=35 // pred_fallthru
          _
        %s225 = sand.u32 %s30, 1
        %s226 = scalar_lea.sflag [#allocation3], %s225
        %s227 = sand.u32 %s30, 1
        %s228 = smul.addr %s227, 8
        %s229 = scalar_lea.vmem [#allocation2], %s228
        %p230 = pneg %p43
        %p231 = pneg %p40
        %p232 = pneg %p64
        %p233 = pneg %p61
        %p234 = pneg %p85
        %p235 = pneg %p82
        %p236 = pneg %p106
        %p237 = pneg %p103
        %p238 = pneg %p132
        %p239 = pneg %p129
        %s240 = sand.u32 %s119, 1
        %s241 = scalar_lea.sflag [#allocation4], %s240
        %s242 = sand.u32 %s119, 1
        %s243 = smul.addr %s242, 16
        %s244 = scalar_lea.vmem [#allocation8], %s243
        %v246 = vld [vmem:[%s212] sm:$0xf]
        %v247 = vld [vmem:[%s212 + $0x4] sm:$0xf]
        %v248 = vld [vmem:[#allocation5] sm:$0xf]
        %v249 = vld [vmem:[#allocation5 + $0x4] sm:$0xf]
        %v250 = vld [vmem:[#allocation5 + $0x8] sm:$0xf]
        %v251 = vld [vmem:[#allocation5 + $0xc] sm:$0xf]
        %v254 = vunpack.c.l.b16 %v246
        %v255 = vunpack.c.l.b16 %v247
        %v256 = vpack.c.b16 %v255, %v254
        %v261 = vunpack.c.l.b16 %v248
        %v262 = vunpack.c.l.b16 %v249
        %v263 = vunpack.c.l.b16 %v250
        %v264 = vunpack.c.l.b16 %v251
        %v265 = vpack.c.b16 %v262, %v261
        %v266 = vpack.c.b16 %v264, %v263
        %vm269 = vcmask 261120
        %v271 = vsel %vm269, %v256, 0
        %273 = vmatprep.subr.bf16.mxu0 0
        %274 = vmatpush1.bf16.msra.mxu0 0
        %275 = vmatprep.subr.bf16.mxu0 0
        %276 = vmatpush1.bf16.msra.mxu0 0
        %277 = vmatprep.subr.bf16.mxu0 0
        %278 = vmatpush1.bf16.msra.mxu0 0
        %279 = vmatprep.subr.bf16.mxu0 0
        %280 = vmatpush1.bf16.msra.mxu0 0
        %281 = vmatprep.subr.bf16.mxu0 0
        %282 = vmatpush1.bf16.msra.mxu0 0
        %283 = vmatprep.subr.bf16.mxu0 0
        %284 = vmatpush1.bf16.msra.mxu0 0
        %285 = vmatprep.subr.bf16.mxu0 0
        %286 = vmatpush1.bf16.msra.mxu0 %v266
        %287 = vmatprep.subr.bf16.mxu0 0
        %288 = vmatpush1.bf16.msra.mxu0 %v265
        %289 = vmatprep.subr.bf16.mxu0 0
        %290 = vmatpush2.bf16.msra.mxu0 0
        %291 = vmatprep.subr.bf16.mxu0 0
        %292 = vmatpush2.bf16.msra.mxu0 0
        %293 = vmatprep.subr.bf16.mxu0 0
        %294 = vmatpush2.bf16.msra.mxu0 0
        %295 = vmatprep.subr.bf16.mxu0 0
        %296 = vmatpush2.bf16.msra.mxu0 0
        %297 = vmatprep.subr.bf16.mxu0 0
        %298 = vmatpush2.bf16.msra.mxu0 0
        %299 = vmatprep.subr.bf16.mxu0 0
        %300 = vmatpush2.bf16.msra.mxu0 0
        %301 = vmatprep.subr.bf16.mxu0 0
        %302 = vmatpush2.bf16.msra.mxu0 0
        %303 = vmatprep.subr.bf16.mxu0 0
        %304 = vmatpush2.bf16.msra.mxu0 0
        %305 = vmatprep.mubr.bf16.mxu0 0
        %306 = vmatmul.mubr.bf16.gmra.mxu0 %v271
        %v307 = vpop.f32.mrf.mxu0
        %v308 = vadd.f32 0.0, %v307
        %v309 = vpop.f32.mrf.mxu0
        %v310 = vpop.f32.mrf.mxu0
        %v311 = vadd.f32 0.0, %v310
        %v312 = vpop.f32.mrf.mxu0
        %313 = vdwg.mxu0
        %v314 = vpack.c.bf16 %v311, %v308
        %316 = vrot.lane.b32.xlu0 %v314, 120
        %v317 = vpop.permute.xlu0 %316
        %318 = vrot.lane.b32.xlu0 %v314, 112
        %v319 = vpop.permute.xlu0 %318
        %320 = vrot.lane.b32.xlu0 %v314, 104
        %v321 = vpop.permute.xlu0 %320
        %322 = vrot.lane.b32.xlu0 %v314, 96
        %v323 = vpop.permute.xlu0 %322
        %324 = vrot.lane.b32.xlu0 %v314, 88
        %v325 = vpop.permute.xlu0 %324
        %326 = vrot.lane.b32.xlu0 %v314, 80
        %v327 = vpop.permute.xlu0 %326
        %328 = vrot.lane.b32.xlu0 %v314, 72
        %v329 = vpop.permute.xlu0 %328
        %330 = vrot.lane.b32.xlu0 %v314, 64
        %v331 = vpop.permute.xlu0 %330
        %332 = vrot.lane.b32.xlu0 %v314, 56
        %v333 = vpop.permute.xlu0 %332
        %334 = vrot.lane.b32.xlu0 %v314, 48
        %v335 = vpop.permute.xlu0 %334
        %336 = vrot.lane.b32.xlu0 %v314, 40
        %v337 = vpop.permute.xlu0 %336
        %v340 = vpack.i.b16 %v317, %v314
        %v342 = vshrl.u32 %v314, 16
        %v343 = vshrl.u32 %v317, 16
        %v344 = vpack.i.b16 %v343, %v342
        %v348 = vpack.i.b16 %v321, %v319
        %v350 = vshrl.u32 %v319, 16
        %v351 = vshrl.u32 %v321, 16
        %v352 = vpack.i.b16 %v351, %v350
        %v356 = vpack.i.b16 %v325, %v323
        %v358 = vshrl.u32 %v323, 16
        %v359 = vshrl.u32 %v325, 16
        %v360 = vpack.i.b16 %v359, %v358
        %v364 = vpack.i.b16 %v329, %v327
        %v366 = vshrl.u32 %v327, 16
        %v367 = vshrl.u32 %v329, 16
        %v368 = vpack.i.b16 %v367, %v366
        %v372 = vpack.i.b16 %v333, %v331
        %v374 = vshrl.u32 %v331, 16
        %v375 = vshrl.u32 %v333, 16
        %v376 = vpack.i.b16 %v375, %v374
        %v380 = vpack.i.b16 %v337, %v335
        %v382 = vshrl.u32 %v335, 16
        %v383 = vshrl.u32 %v337, 16
        %v384 = vpack.i.b16 %v383, %v382
        %v387 = vpack.i.b16 0, 0
        %v389 = vshrl.u32 0, 16
        %v390 = vpack.i.b16 %v389, %v389
        %v392 = vcombine.low %v340, %v356
        %v393 = vcombine.high %v340, %v356
        %v395 = vunpack.c.l.s4 1983009808
        %v396 = vunpack.c.0.s8 %v395
        %v397 = vlaneseq
        %v398 = vshrl.u32 %v397, 7
        %v399 = vsub.s32 %v396, %v398
        %v400 = vrot.slane %v392, %v399
        %v402 = vunpack.c.l.s4 1983009808
        %v403 = vunpack.c.0.s8 %v402
        %v404 = vlaneseq
        %v405 = vshrl.u32 %v404, 7
        %v406 = vsub.s32 %v403, %v405
        %v407 = vrot.slane %v393, %v406
        %v408 = vcombine.low %v348, %v364
        %v409 = vcombine.high %v348, %v364
        %v411 = vunpack.c.l.s4 1983009808
        %v412 = vunpack.c.0.s8 %v411
        %v413 = vlaneseq
        %v414 = vshrl.u32 %v413, 7
        %v415 = vsub.s32 %v412, %v414
        %v416 = vrot.slane %v408, %v415
        %v418 = vunpack.c.l.s4 1983009808
        %v419 = vunpack.c.0.s8 %v418
        %v420 = vlaneseq
        %v421 = vshrl.u32 %v420, 7
        %v422 = vsub.s32 %v419, %v421
        %v423 = vrot.slane %v409, %v422
        %v424 = vcombine.high %v372, %v387
        %v426 = vunpack.c.l.s4 1983009808
        %v427 = vunpack.c.0.s8 %v426
        %v428 = vlaneseq
        %v429 = vshrl.u32 %v428, 7
        %v430 = vsub.s32 %v427, %v429
        %v431 = vrot.slane %v372, %v430
        %v433 = vunpack.c.l.s4 1983009808
        %v434 = vunpack.c.0.s8 %v433
        %v435 = vlaneseq
        %v436 = vshrl.u32 %v435, 7
        %v437 = vsub.s32 %v434, %v436
        %v438 = vrot.slane %v424, %v437
        %v439 = vcombine.high %v380, %v387
        %v441 = vunpack.c.l.s4 1983009808
        %v442 = vunpack.c.0.s8 %v441
        %v443 = vlaneseq
        %v444 = vshrl.u32 %v443, 7
        %v445 = vsub.s32 %v442, %v444
        %v446 = vrot.slane %v380, %v445
        %v448 = vunpack.c.l.s4 1983009808
        %v449 = vunpack.c.0.s8 %v448
        %v450 = vlaneseq
        %v451 = vshrl.u32 %v450, 7
        %v452 = vsub.s32 %v449, %v451
        %v453 = vrot.slane %v439, %v452
        %v454 = vcombine.low %v400, %v416
        %v455 = vcombine.high %v400, %v416
        %v457 = vunpack.c.l.s4 1934713408
        %v458 = vunpack.c.0.s8 %v457
        %v459 = vlaneseq
        %v460 = vshrl.u32 %v459, 7
        %v461 = vsub.s32 %v458, %v460
        %v462 = vrot.slane %v454, %v461
        %v464 = vunpack.c.l.s4 1934713408
        %v465 = vunpack.c.0.s8 %v464
        %v466 = vlaneseq
        %v467 = vshrl.u32 %v466, 7
        %v468 = vsub.s32 %v465, %v467
        %v469 = vrot.slane %v455, %v468
        %v470 = vcombine.low %v407, %v423
        %v471 = vcombine.high %v407, %v423
        %v473 = vunpack.c.l.s4 1934713408
        %v474 = vunpack.c.0.s8 %v473
        %v475 = vlaneseq
        %v476 = vshrl.u32 %v475, 7
        %v477 = vsub.s32 %v474, %v476
        %v478 = vrot.slane %v470, %v477
        %v480 = vunpack.c.l.s4 1934713408
        %v481 = vunpack.c.0.s8 %v480
        %v482 = vlaneseq
        %v483 = vshrl.u32 %v482, 7
        %v484 = vsub.s32 %v481, %v483
        %v485 = vrot.slane %v471, %v484
        %v486 = vcombine.low %v431, %v446
        %v487 = vcombine.high %v431, %v446
        %v489 = vunpack.c.l.s4 1934713408
        %v490 = vunpack.c.0.s8 %v489
        %v491 = vlaneseq
        %v492 = vshrl.u32 %v491, 7
        %v493 = vsub.s32 %v490, %v492
        %v494 = vrot.slane %v486, %v493
        %v496 = vunpack.c.l.s4 1934713408
        %v497 = vunpack.c.0.s8 %v496
        %v498 = vlaneseq
        %v499 = vshrl.u32 %v498, 7
        %v500 = vsub.s32 %v497, %v499
        %v501 = vrot.slane %v487, %v500
        %v502 = vcombine.low %v438, %v453
        %v503 = vcombine.high %v438, %v453
        %v505 = vunpack.c.l.s4 1934713408
        %v506 = vunpack.c.0.s8 %v505
        %v507 = vlaneseq
        %v508 = vshrl.u32 %v507, 7
        %v509 = vsub.s32 %v506, %v508
        %v510 = vrot.slane %v502, %v509
        %v512 = vunpack.c.l.s4 1934713408
        %v513 = vunpack.c.0.s8 %v512
        %v514 = vlaneseq
        %v515 = vshrl.u32 %v514, 7
        %v516 = vsub.s32 %v513, %v515
        %v517 = vrot.slane %v503, %v516
        %v518 = vcombine.low %v462, %v494
        %v519 = vcombine.high %v462, %v494
        %v520 = vcombine.low %v469, %v501
        %v521 = vcombine.high %v469, %v501
        %v522 = vcombine.low %v478, %v510
        %v523 = vcombine.high %v478, %v510
        %v524 = vcombine.low %v485, %v517
        %v525 = vcombine.high %v485, %v517
        %v526 = vcombine.low %v344, %v360
        %v527 = vcombine.high %v344, %v360
        %v529 = vunpack.c.l.s4 1983009808
        %v530 = vunpack.c.0.s8 %v529
        %v531 = vlaneseq
        %v532 = vshrl.u32 %v531, 7
        %v533 = vsub.s32 %v530, %v532
        %v534 = vrot.slane %v526, %v533
        %v536 = vunpack.c.l.s4 1983009808
        %v537 = vunpack.c.0.s8 %v536
        %v538 = vlaneseq
        %v539 = vshrl.u32 %v538, 7
        %v540 = vsub.s32 %v537, %v539
        %v541 = vrot.slane %v527, %v540
        %v542 = vcombine.low %v352, %v368
        %v543 = vcombine.high %v352, %v368
        %v545 = vunpack.c.l.s4 1983009808
        %v546 = vunpack.c.0.s8 %v545
        %v547 = vlaneseq
        %v548 = vshrl.u32 %v547, 7
        %v549 = vsub.s32 %v546, %v548
        %v550 = vrot.slane %v542, %v549
        %v552 = vunpack.c.l.s4 1983009808
        %v553 = vunpack.c.0.s8 %v552
        %v554 = vlaneseq
        %v555 = vshrl.u32 %v554, 7
        %v556 = vsub.s32 %v553, %v555
        %v557 = vrot.slane %v543, %v556
        %v558 = vcombine.high %v376, %v390
        %v560 = vunpack.c.l.s4 1983009808
        %v561 = vunpack.c.0.s8 %v560
        %v562 = vlaneseq
        %v563 = vshrl.u32 %v562, 7
        %v564 = vsub.s32 %v561, %v563
        %v565 = vrot.slane %v376, %v564
        %v567 = vunpack.c.l.s4 1983009808
        %v568 = vunpack.c.0.s8 %v567
        %v569 = vlaneseq
        %v570 = vshrl.u32 %v569, 7
        %v571 = vsub.s32 %v568, %v570
        %v572 = vrot.slane %v558, %v571
        %v573 = vcombine.high %v384, %v390
        %v575 = vunpack.c.l.s4 1983009808
        %v576 = vunpack.c.0.s8 %v575
        %v577 = vlaneseq
        %v578 = vshrl.u32 %v577, 7
        %v579 = vsub.s32 %v576, %v578
        %v580 = vrot.slane %v384, %v579
        %v582 = vunpack.c.l.s4 1983009808
        %v583 = vunpack.c.0.s8 %v582
        %v584 = vlaneseq
        %v585 = vshrl.u32 %v584, 7
        %v586 = vsub.s32 %v583, %v585
        %v587 = vrot.slane %v573, %v586
        %v588 = vcombine.low %v534, %v550
        %v589 = vcombine.high %v534, %v550
        %v591 = vunpack.c.l.s4 1934713408
        %v592 = vunpack.c.0.s8 %v591
        %v593 = vlaneseq
        %v594 = vshrl.u32 %v593, 7
        %v595 = vsub.s32 %v592, %v594
        %v596 = vrot.slane %v588, %v595
        %v598 = vunpack.c.l.s4 1934713408
        %v599 = vunpack.c.0.s8 %v598
        %v600 = vlaneseq
        %v601 = vshrl.u32 %v600, 7
        %v602 = vsub.s32 %v599, %v601
        %v603 = vrot.slane %v589, %v602
        %v604 = vcombine.low %v541, %v557
        %v605 = vcombine.high %v541, %v557
        %v607 = vunpack.c.l.s4 1934713408
        %v608 = vunpack.c.0.s8 %v607
        %v609 = vlaneseq
        %v610 = vshrl.u32 %v609, 7
        %v611 = vsub.s32 %v608, %v610
        %v612 = vrot.slane %v604, %v611
        %v614 = vunpack.c.l.s4 1934713408
        %v615 = vunpack.c.0.s8 %v614
        %v616 = vlaneseq
        %v617 = vshrl.u32 %v616, 7
        %v618 = vsub.s32 %v615, %v617
        %v619 = vrot.slane %v605, %v618
        %v620 = vcombine.low %v565, %v580
        %v621 = vcombine.high %v565, %v580
        %v623 = vunpack.c.l.s4 1934713408
        %v624 = vunpack.c.0.s8 %v623
        %v625 = vlaneseq
        %v626 = vshrl.u32 %v625, 7
        %v627 = vsub.s32 %v624, %v626
        %v628 = vrot.slane %v620, %v627
        %v630 = vunpack.c.l.s4 1934713408
        %v631 = vunpack.c.0.s8 %v630
        %v632 = vlaneseq
        %v633 = vshrl.u32 %v632, 7
        %v634 = vsub.s32 %v631, %v633
        %v635 = vrot.slane %v621, %v634
        %v636 = vcombine.low %v572, %v587
        %v637 = vcombine.high %v572, %v587
        %v639 = vunpack.c.l.s4 1934713408
        %v640 = vunpack.c.0.s8 %v639
        %v641 = vlaneseq
        %v642 = vshrl.u32 %v641, 7
        %v643 = vsub.s32 %v640, %v642
        %v644 = vrot.slane %v636, %v643
        %v646 = vunpack.c.l.s4 1934713408
        %v647 = vunpack.c.0.s8 %v646
        %v648 = vlaneseq
        %v649 = vshrl.u32 %v648, 7
        %v650 = vsub.s32 %v647, %v649
        %v651 = vrot.slane %v637, %v650
        %v652 = vcombine.low %v596, %v628
        %v653 = vcombine.high %v596, %v628
        %v654 = vcombine.low %v603, %v635
        %v655 = vcombine.high %v603, %v635
        %v656 = vcombine.low %v612, %v644
        %v657 = vcombine.high %v612, %v644
        %v658 = vcombine.low %v619, %v651
        %v659 = vcombine.high %v619, %v651
        %v660 = vcombine.low %v518, %v520
        %v661 = vcombine.high %v518, %v520
        %v663 = vunpack.c.l.s4 1983009808
        %v664 = vunpack.c.0.s8 %v663
        %v665 = vlaneseq
        %v666 = vshrl.u32 %v665, 7
        %v667 = vsub.s32 %v664, %v666
        %v668 = vrot.slane %v660, %v667
        %v670 = vunpack.c.l.s4 1983009808
        %v671 = vunpack.c.0.s8 %v670
        %v672 = vlaneseq
        %v673 = vshrl.u32 %v672, 7
        %v674 = vsub.s32 %v671, %v673
        %v675 = vrot.slane %v661, %v674
        %v676 = vcombine.low %v519, %v521
        %v677 = vcombine.high %v519, %v521
        %v679 = vunpack.c.l.s4 1983009808
        %v680 = vunpack.c.0.s8 %v679
        %v681 = vlaneseq
        %v682 = vshrl.u32 %v681, 7
        %v683 = vsub.s32 %v680, %v682
        %v684 = vrot.slane %v676, %v683
        %v686 = vunpack.c.l.s4 1983009808
        %v687 = vunpack.c.0.s8 %v686
        %v688 = vlaneseq
        %v689 = vshrl.u32 %v688, 7
        %v690 = vsub.s32 %v687, %v689
        %v691 = vrot.slane %v677, %v690
        %v692 = vcombine.low %v522, %v524
        %v693 = vcombine.high %v522, %v524
        %v695 = vunpack.c.l.s4 1983009808
        %v696 = vunpack.c.0.s8 %v695
        %v697 = vlaneseq
        %v698 = vshrl.u32 %v697, 7
        %v699 = vsub.s32 %v696, %v698
        %v700 = vrot.slane %v692, %v699
        %v702 = vunpack.c.l.s4 1983009808
        %v703 = vunpack.c.0.s8 %v702
        %v704 = vlaneseq
        %v705 = vshrl.u32 %v704, 7
        %v706 = vsub.s32 %v703, %v705
        %v707 = vrot.slane %v693, %v706
        %v708 = vcombine.low %v523, %v525
        %v709 = vcombine.high %v523, %v525
        %v711 = vunpack.c.l.s4 1983009808
        %v712 = vunpack.c.0.s8 %v711
        %v713 = vlaneseq
        %v714 = vshrl.u32 %v713, 7
        %v715 = vsub.s32 %v712, %v714
        %v716 = vrot.slane %v708, %v715
        %v718 = vunpack.c.l.s4 1983009808
        %v719 = vunpack.c.0.s8 %v718
        %v720 = vlaneseq
        %v721 = vshrl.u32 %v720, 7
        %v722 = vsub.s32 %v719, %v721
        %v723 = vrot.slane %v709, %v722
        %v724 = vcombine.low %v668, %v684
        %v725 = vcombine.high %v668, %v684
        %v727 = vunpack.c.l.s4 1934713408
        %v728 = vunpack.c.0.s8 %v727
        %v729 = vlaneseq
        %v730 = vshrl.u32 %v729, 7
        %v731 = vsub.s32 %v728, %v730
        %v732 = vrot.slane %v724, %v731
        %v734 = vunpack.c.l.s4 1934713408
        %v735 = vunpack.c.0.s8 %v734
        %v736 = vlaneseq
        %v737 = vshrl.u32 %v736, 7
        %v738 = vsub.s32 %v735, %v737
        %v739 = vrot.slane %v725, %v738
        %v740 = vcombine.low %v675, %v691
        %v742 = vunpack.c.l.s4 1934713408
        %v743 = vunpack.c.0.s8 %v742
        %v744 = vlaneseq
        %v745 = vshrl.u32 %v744, 7
        %v746 = vsub.s32 %v743, %v745
        %v747 = vrot.slane %v740, %v746
        %v748 = vcombine.low %v700, %v716
        %v749 = vcombine.high %v700, %v716
        %v751 = vunpack.c.l.s4 1934713408
        %v752 = vunpack.c.0.s8 %v751
        %v753 = vlaneseq
        %v754 = vshrl.u32 %v753, 7
        %v755 = vsub.s32 %v752, %v754
        %v756 = vrot.slane %v748, %v755
        %v758 = vunpack.c.l.s4 1934713408
        %v759 = vunpack.c.0.s8 %v758
        %v760 = vlaneseq
        %v761 = vshrl.u32 %v760, 7
        %v762 = vsub.s32 %v759, %v761
        %v763 = vrot.slane %v749, %v762
        %v764 = vcombine.low %v707, %v723
        %v766 = vunpack.c.l.s4 1934713408
        %v767 = vunpack.c.0.s8 %v766
        %v768 = vlaneseq
        %v769 = vshrl.u32 %v768, 7
        %v770 = vsub.s32 %v767, %v769
        %v771 = vrot.slane %v764, %v770
        %v772 = vcombine.low %v732, %v756
        %v773 = vcombine.high %v732, %v756
        %v774 = vcombine.low %v739, %v763
        %v775 = vcombine.high %v739, %v763
        %v776 = vcombine.low %v747, %v771
        %v777 = vcombine.high %v747, %v771
        %v778 = vcombine.low %v652, %v654
        %v779 = vcombine.high %v652, %v654
        %v781 = vunpack.c.l.s4 1983009808
        %v782 = vunpack.c.0.s8 %v781
        %v783 = vlaneseq
        %v784 = vshrl.u32 %v783, 7
        %v785 = vsub.s32 %v782, %v784
        %v786 = vrot.slane %v778, %v785
        %v788 = vunpack.c.l.s4 1983009808
        %v789 = vunpack.c.0.s8 %v788
        %v790 = vlaneseq
        %v791 = vshrl.u32 %v790, 7
        %v792 = vsub.s32 %v789, %v791
        %v793 = vrot.slane %v779, %v792
        %v794 = vcombine.low %v653, %v655
        %v795 = vcombine.high %v653, %v655
        %v797 = vunpack.c.l.s4 1983009808
        %v798 = vunpack.c.0.s8 %v797
        %v799 = vlaneseq
        %v800 = vshrl.u32 %v799, 7
        %v801 = vsub.s32 %v798, %v800
        %v802 = vrot.slane %v794, %v801
        %v804 = vunpack.c.l.s4 1983009808
        %v805 = vunpack.c.0.s8 %v804
        %v806 = vlaneseq
        %v807 = vshrl.u32 %v806, 7
        %v808 = vsub.s32 %v805, %v807
        %v809 = vrot.slane %v795, %v808
        %v810 = vcombine.low %v656, %v658
        %v811 = vcombine.high %v656, %v658
        %v813 = vunpack.c.l.s4 1983009808
        %v814 = vunpack.c.0.s8 %v813
        %v815 = vlaneseq
        %v816 = vshrl.u32 %v815, 7
        %v817 = vsub.s32 %v814, %v816
        %v818 = vrot.slane %v810, %v817
        %v820 = vunpack.c.l.s4 1983009808
        %v821 = vunpack.c.0.s8 %v820
        %v822 = vlaneseq
        %v823 = vshrl.u32 %v822, 7
        %v824 = vsub.s32 %v821, %v823
        %v825 = vrot.slane %v811, %v824
        %v826 = vcombine.low %v657, %v659
        %v827 = vcombine.high %v657, %v659
        %v829 = vunpack.c.l.s4 1983009808
        %v830 = vunpack.c.0.s8 %v829
        %v831 = vlaneseq
        %v832 = vshrl.u32 %v831, 7
        %v833 = vsub.s32 %v830, %v832
        %v834 = vrot.slane %v826, %v833
        %v836 = vunpack.c.l.s4 1983009808
        %v837 = vunpack.c.0.s8 %v836
        %v838 = vlaneseq
        %v839 = vshrl.u32 %v838, 7
        %v840 = vsub.s32 %v837, %v839
        %v841 = vrot.slane %v827, %v840
        %v842 = vcombine.low %v786, %v802
        %v843 = vcombine.high %v786, %v802
        %v845 = vunpack.c.l.s4 1934713408
        %v846 = vunpack.c.0.s8 %v845
        %v847 = vlaneseq
        %v848 = vshrl.u32 %v847, 7
        %v849 = vsub.s32 %v846, %v848
        %v850 = vrot.slane %v842, %v849
        %v852 = vunpack.c.l.s4 1934713408
        %v853 = vunpack.c.0.s8 %v852
        %v854 = vlaneseq
        %v855 = vshrl.u32 %v854, 7
        %v856 = vsub.s32 %v853, %v855
        %v857 = vrot.slane %v843, %v856
        %v858 = vcombine.low %v793, %v809
        %v860 = vunpack.c.l.s4 1934713408
        %v861 = vunpack.c.0.s8 %v860
        %v862 = vlaneseq
        %v863 = vshrl.u32 %v862, 7
        %v864 = vsub.s32 %v861, %v863
        %v865 = vrot.slane %v858, %v864
        %v866 = vcombine.low %v818, %v834
        %v867 = vcombine.high %v818, %v834
        %v869 = vunpack.c.l.s4 1934713408
        %v870 = vunpack.c.0.s8 %v869
        %v871 = vlaneseq
        %v872 = vshrl.u32 %v871, 7
        %v873 = vsub.s32 %v870, %v872
        %v874 = vrot.slane %v866, %v873
        %v876 = vunpack.c.l.s4 1934713408
        %v877 = vunpack.c.0.s8 %v876
        %v878 = vlaneseq
        %v879 = vshrl.u32 %v878, 7
        %v880 = vsub.s32 %v877, %v879
        %v881 = vrot.slane %v867, %v880
        %v882 = vcombine.low %v825, %v841
        %v884 = vunpack.c.l.s4 1934713408
        %v885 = vunpack.c.0.s8 %v884
        %v886 = vlaneseq
        %v887 = vshrl.u32 %v886, 7
        %v888 = vsub.s32 %v885, %v887
        %v889 = vrot.slane %v882, %v888
        %v890 = vcombine.low %v850, %v874
        %v891 = vcombine.high %v850, %v874
        %v892 = vcombine.low %v857, %v881
        %v893 = vcombine.high %v857, %v881
        %v894 = vcombine.low %v865, %v889
        %v895 = vcombine.high %v865, %v889
        %v898 = vpack.i.b16 %v890, %v772
        %v899 = vshrl.u32 %v772, 16
        %v900 = vshrl.u32 %v890, 16
        %v901 = vpack.i.b16 %v900, %v899
        %v904 = vpack.i.b16 %v891, %v773
        %v905 = vshrl.u32 %v773, 16
        %v906 = vshrl.u32 %v891, 16
        %v907 = vpack.i.b16 %v906, %v905
        %v910 = vpack.i.b16 %v892, %v774
        %v911 = vshrl.u32 %v774, 16
        %v912 = vshrl.u32 %v892, 16
        %v913 = vpack.i.b16 %v912, %v911
        %v916 = vpack.i.b16 %v893, %v775
        %v917 = vshrl.u32 %v775, 16
        %v918 = vshrl.u32 %v893, 16
        %v919 = vpack.i.b16 %v918, %v917
        %v922 = vpack.i.b16 %v894, %v776
        %v924 = vshrl.u32 %v776, 16
        %v925 = vshrl.u32 %v894, 16
        %v926 = vpack.i.b16 %v925, %v924
        %v930 = vpack.i.b16 %v895, %v777
        %v932 = vshrl.u32 %v777, 16
        %v933 = vshrl.u32 %v895, 16
        %v934 = vpack.i.b16 %v933, %v932
        %vm936 = vcmask 64512
        %v938 = vsel %vm936, %v898, 0
        %v941 = vsel %vm936, %v910, 0
        %943 = vmatprep.subr.bf16.mxu0 0
        %944 = vmatpush1.bf16.xpose.msra.mxu0 0
        %945 = vmatprep.subr.bf16.mxu0 0
        %946 = vmatpush1.bf16.xpose.msra.mxu0 0
        %947 = vmatprep.subr.bf16.mxu0 0
        %948 = vmatpush1.bf16.xpose.msra.mxu0 0
        %949 = vmatprep.subr.bf16.mxu0 0
        %950 = vmatpush1.bf16.xpose.msra.mxu0 0
        %951 = vmatprep.subr.bf16.mxu0 0
        %952 = vmatpush1.bf16.xpose.msra.mxu0 0
        %953 = vmatprep.subr.bf16.mxu0 0
        %954 = vmatpush1.bf16.xpose.msra.mxu0 0
        %955 = vmatprep.subr.bf16.mxu0 0
        %956 = vmatpush1.bf16.xpose.msra.mxu0 0
        %957 = vmatprep.subr.bf16.mxu0 0
        %958 = vmatpush1.bf16.xpose.msra.mxu0 %v941
        %959 = vmatprep.subr.bf16.mxu0 0
        %960 = vmatpush2.bf16.xpose.msra.mxu0 0
        %961 = vmatprep.subr.bf16.mxu0 0
        %962 = vmatpush2.bf16.xpose.msra.mxu0 0
        %963 = vmatprep.subr.bf16.mxu0 0
        %964 = vmatpush2.bf16.xpose.msra.mxu0 0
        %965 = vmatprep.subr.bf16.mxu0 0
        %966 = vmatpush2.bf16.xpose.msra.mxu0 0
        %967 = vmatprep.subr.bf16.mxu0 0
        %968 = vmatpush2.bf16.xpose.msra.mxu0 0
        %969 = vmatprep.subr.bf16.mxu0 0
        %970 = vmatpush2.bf16.xpose.msra.mxu0 0
        %971 = vmatprep.subr.bf16.mxu0 0
        %972 = vmatpush2.bf16.xpose.msra.mxu0 0
        %973 = vmatprep.subr.bf16.mxu0 0
        %974 = vmatpush2.bf16.xpose.msra.mxu0 0
        %975 = vmatprep.mubr.bf16.mxu0 0
        %976 = vmatmul.mubr.bf16.gmra.mxu0 %v938
        %v977 = vpop.f32.mrf.mxu0
        %v978 = vadd.f32 0.0, %v977
        %v979 = vpop.f32.mrf.mxu0
        %v980 = vpop.f32.mrf.mxu0
        %v981 = vadd.f32 0.0, %v980
        %v982 = vpop.f32.mrf.mxu0
        %983 = vdwg.mxu0
        %v985 = vsel %vm936, %v901, 0
        %v988 = vsel %vm936, %v913, 0
        %990 = vmatprep.subr.bf16.mxu0 0
        %991 = vmatpush1.bf16.xpose.msra.mxu0 0
        %992 = vmatprep.subr.bf16.mxu0 0
        %993 = vmatpush1.bf16.xpose.msra.mxu0 0
        %994 = vmatprep.subr.bf16.mxu0 0
        %995 = vmatpush1.bf16.xpose.msra.mxu0 0
        %996 = vmatprep.subr.bf16.mxu0 0
        %997 = vmatpush1.bf16.xpose.msra.mxu0 0
        %998 = vmatprep.subr.bf16.mxu0 0
        %999 = vmatpush1.bf16.xpose.msra.mxu0 0
        %1000 = vmatprep.subr.bf16.mxu0 0
        %1001 = vmatpush1.bf16.xpose.msra.mxu0 0
        %1002 = vmatprep.subr.bf16.mxu0 0
        %1003 = vmatpush1.bf16.xpose.msra.mxu0 0
        %1004 = vmatprep.subr.bf16.mxu0 0
        %1005 = vmatpush1.bf16.xpose.msra.mxu0 %v988
        %1006 = vmatprep.subr.bf16.mxu0 0
        %1007 = vmatpush2.bf16.xpose.msra.mxu0 0
        %1008 = vmatprep.subr.bf16.mxu0 0
        %1009 = vmatpush2.bf16.xpose.msra.mxu0 0
        %1010 = vmatprep.subr.bf16.mxu0 0
        %1011 = vmatpush2.bf16.xpose.msra.mxu0 0
        %1012 = vmatprep.subr.bf16.mxu0 0
        %1013 = vmatpush2.bf16.xpose.msra.mxu0 0
        %1014 = vmatprep.subr.bf16.mxu0 0
        %1015 = vmatpush2.bf16.xpose.msra.mxu0 0
        %1016 = vmatprep.subr.bf16.mxu0 0
        %1017 = vmatpush2.bf16.xpose.msra.mxu0 0
        %1018 = vmatprep.subr.bf16.mxu0 0
        %1019 = vmatpush2.bf16.xpose.msra.mxu0 0
        %1020 = vmatprep.subr.bf16.mxu0 0
        %1021 = vmatpush2.bf16.xpose.msra.mxu0 0
        %1022 = vmatprep.mubr.bf16.mxu0 0
        %1023 = vmatmul.mubr.bf16.gmra.mxu0 %v985
        %v1024 = vpop.f32.mrf.mxu0
        %v1025 = vadd.f32 0.0, %v1024
        %v1026 = vpop.f32.mrf.mxu0
        %v1027 = vpop.f32.mrf.mxu0
        %v1028 = vadd.f32 0.0, %v1027
        %v1029 = vpop.f32.mrf.mxu0
        %1030 = vdwg.mxu0
        %v1032 = vsel %vm936, %v904, 0
        %v1035 = vsel %vm936, %v916, 0
        %1037 = vmatprep.subr.bf16.mxu0 0
        %1038 = vmatpush1.bf16.xpose.msra.mxu0 0
        %1039 = vmatprep.subr.bf16.mxu0 0
        %1040 = vmatpush1.bf16.xpose.msra.mxu0 0
        %1041 = vmatprep.subr.bf16.mxu0 0
        %1042 = vmatpush1.bf16.xpose.msra.mxu0 0
        %1043 = vmatprep.subr.bf16.mxu0 0
        %1044 = vmatpush1.bf16.xpose.msra.mxu0 0
        %1045 = vmatprep.subr.bf16.mxu0 0
        %1046 = vmatpush1.bf16.xpose.msra.mxu0 0
        %1047 = vmatprep.subr.bf16.mxu0 0
        %1048 = vmatpush1.bf16.xpose.msra.mxu0 0
        %1049 = vmatprep.subr.bf16.mxu0 0
        %1050 = vmatpush1.bf16.xpose.msra.mxu0 0
        %1051 = vmatprep.subr.bf16.mxu0 0
        %1052 = vmatpush1.bf16.xpose.msra.mxu0 %v1035
        %1053 = vmatprep.subr.bf16.mxu0 0
        %1054 = vmatpush2.bf16.xpose.msra.mxu0 0
        %1055 = vmatprep.subr.bf16.mxu0 0
        %1056 = vmatpush2.bf16.xpose.msra.mxu0 0
        %1057 = vmatprep.subr.bf16.mxu0 0
        %1058 = vmatpush2.bf16.xpose.msra.mxu0 0
        %1059 = vmatprep.subr.bf16.mxu0 0
        %1060 = vmatpush2.bf16.xpose.msra.mxu0 0
        %1061 = vmatprep.subr.bf16.mxu0 0
        %1062 = vmatpush2.bf16.xpose.msra.mxu0 0
        %1063 = vmatprep.subr.bf16.mxu0 0
        %1064 = vmatpush2.bf16.xpose.msra.mxu0 0
        %1065 = vmatprep.subr.bf16.mxu0 0
        %1066 = vmatpush2.bf16.xpose.msra.mxu0 0
        %1067 = vmatprep.subr.bf16.mxu0 0
        %1068 = vmatpush2.bf16.xpose.msra.mxu0 0
        %1069 = vmatprep.mubr.bf16.mxu0 0
        %1070 = vmatmul.mubr.bf16.gmra.mxu0 %v1032
        %v1071 = vpop.f32.mrf.mxu0
        %v1072 = vadd.f32 0.0, %v1071
        %v1073 = vpop.f32.mrf.mxu0
        %v1074 = vpop.f32.mrf.mxu0
        %v1075 = vadd.f32 0.0, %v1074
        %v1076 = vpop.f32.mrf.mxu0
        %1077 = vdwg.mxu0
        %v1079 = vsel %vm936, %v907, 0
        %v1082 = vsel %vm936, %v919, 0
        %1084 = vmatprep.subr.bf16.mxu0 0
        %1085 = vmatpush1.bf16.xpose.msra.mxu0 0
        %1086 = vmatprep.subr.bf16.mxu0 0
        %1087 = vmatpush1.bf16.xpose.msra.mxu0 0
        %1088 = vmatprep.subr.bf16.mxu0 0
        %1089 = vmatpush1.bf16.xpose.msra.mxu0 0
        %1090 = vmatprep.subr.bf16.mxu0 0
        %1091 = vmatpush1.bf16.xpose.msra.mxu0 0
        %1092 = vmatprep.subr.bf16.mxu0 0
        %1093 = vmatpush1.bf16.xpose.msra.mxu0 0
        %1094 = vmatprep.subr.bf16.mxu0 0
        %1095 = vmatpush1.bf16.xpose.msra.mxu0 0
        %1096 = vmatprep.subr.bf16.mxu0 0
        %1097 = vmatpush1.bf16.xpose.msra.mxu0 0
        %1098 = vmatprep.subr.bf16.mxu0 0
        %1099 = vmatpush1.bf16.xpose.msra.mxu0 %v1082
        %1100 = vmatprep.subr.bf16.mxu0 0
        %1101 = vmatpush2.bf16.xpose.msra.mxu0 0
        %1102 = vmatprep.subr.bf16.mxu0 0
        %1103 = vmatpush2.bf16.xpose.msra.mxu0 0
        %1104 = vmatprep.subr.bf16.mxu0 0
        %1105 = vmatpush2.bf16.xpose.msra.mxu0 0
        %1106 = vmatprep.subr.bf16.mxu0 0
        %1107 = vmatpush2.bf16.xpose.msra.mxu0 0
        %1108 = vmatprep.subr.bf16.mxu0 0
        %1109 = vmatpush2.bf16.xpose.msra.mxu0 0
        %1110 = vmatprep.subr.bf16.mxu0 0
        %1111 = vmatpush2.bf16.xpose.msra.mxu0 0
        %1112 = vmatprep.subr.bf16.mxu0 0
        %1113 = vmatpush2.bf16.xpose.msra.mxu0 0
        %1114 = vmatprep.subr.bf16.mxu0 0
        %1115 = vmatpush2.bf16.xpose.msra.mxu0 0
        %1116 = vmatprep.mubr.bf16.mxu0 0
        %1117 = vmatmul.mubr.bf16.gmra.mxu0 %v1079
        %v1118 = vpop.f32.mrf.mxu0
        %v1119 = vadd.f32 0.0, %v1118
        %v1120 = vpop.f32.mrf.mxu0
        %v1121 = vpop.f32.mrf.mxu0
        %v1122 = vadd.f32 0.0, %v1121
        %v1123 = vpop.f32.mrf.mxu0
        %1124 = vdwg.mxu0
        %v1125 = vlaneseq
        %v1126 = vshrl.u32 %v1125, 7
        %v1127 = vadd.s32 %v1126, 8
        %v1128 = vlaneseq
        %v1129 = vand.u32 %v1128, 127
        %vm1130 = vcmp.ge.s32.totalorder %v1126, %v1129
        %vm1131 = vcmp.ge.s32.totalorder %v1127, %v1129
        %v1132 = vsel %vm1130, 1, 0
        %v1133 = vsel %vm1131, 1, 0
        %vm1134 = vcmp.eq.s32.totalorder %v1132, 1
        %vm1135 = vcmp.eq.s32.totalorder %v1133, 1
        %v1136 = vsel %vm1134, %v978, -inf
        %v1137 = vsel %vm1135, %v981, -inf
        %v1138 = vsel %vm1134, %v1025, -inf
        %v1139 = vsel %vm1135, %v1028, -inf
        %v1140 = vsel %vm1134, %v1072, -inf
        %v1141 = vsel %vm1135, %v1075, -inf
        %v1142 = vsel %vm1134, %v1119, -inf
        %v1143 = vsel %vm1135, %v1122, -inf
        %vm1144 = vcmask 130048
        %v1145 = vsel %vm1144, %v1136, -inf
        %1146 = vmax.xlane.f32.xlu0 %v1145
        %v1147 = vpop.xlane.xlu0 %1146
        %v1148 = vsel %vm1144, %v1137, -inf
        %1149 = vmax.xlane.f32.xlu0 %v1148
        %v1150 = vpop.xlane.xlu0 %1149
        %v1151 = vsel %vm1144, %v1138, -inf
        %1152 = vmax.xlane.f32.xlu0 %v1151
        %v1153 = vpop.xlane.xlu0 %1152
        %v1154 = vsel %vm1144, %v1139, -inf
        %1155 = vmax.xlane.f32.xlu0 %v1154
        %v1156 = vpop.xlane.xlu0 %1155
        %v1157 = vsel %vm1144, %v1140, -inf
        %1158 = vmax.xlane.f32.xlu0 %v1157
        %v1159 = vpop.xlane.xlu0 %1158
        %v1160 = vsel %vm1144, %v1141, -inf
        %1161 = vmax.xlane.f32.xlu0 %v1160
        %v1162 = vpop.xlane.xlu0 %1161
        %v1163 = vsel %vm1144, %v1142, -inf
        %1164 = vmax.xlane.f32.xlu0 %v1163
        %v1165 = vpop.xlane.xlu0 %1164
        %v1166 = vsel %vm1144, %v1143, -inf
        %1167 = vmax.xlane.f32.xlu0 %v1166
        %v1168 = vpop.xlane.xlu0 %1167
        %v1169 = vsub.f32 %v1136, %v1147
        %v1170 = vsub.f32 %v1137, %v1150
        %v1171 = vsub.f32 %v1138, %v1153
        %v1172 = vsub.f32 %v1139, %v1156
        %v1173 = vsub.f32 %v1140, %v1159
        %v1174 = vsub.f32 %v1141, %v1162
        %v1175 = vsub.f32 %v1142, %v1165
        %v1176 = vsub.f32 %v1143, %v1168
        %v1177 = vmul.f32 %v1169, 1.442695
        %v1178 = vpow.pop %v1177
        %v1179 = vmul.f32 %v1170, 1.442695
        %v1180 = vpow.pop %v1179
        %v1181 = vmul.f32 %v1171, 1.442695
        %v1182 = vpow.pop %v1181
        %v1183 = vmul.f32 %v1172, 1.442695
        %v1184 = vpow.pop %v1183
        %v1185 = vmul.f32 %v1173, 1.442695
        %v1186 = vpow.pop %v1185
        %v1187 = vmul.f32 %v1174, 1.442695
        %v1188 = vpow.pop %v1187
        %v1189 = vmul.f32 %v1175, 1.442695
        %v1190 = vpow.pop %v1189
        %v1191 = vmul.f32 %v1176, 1.442695
        %v1192 = vpow.pop %v1191
        %v1193 = vsel %vm1144, %v1178, 0.0
        %1194 = vadd.xlane.f32.xlu0 %v1193
        %v1195 = vpop.xlane.xlu0 %1194
        %v1196 = vsel %vm1144, %v1180, 0.0
        %1197 = vadd.xlane.f32.xlu0 %v1196
        %v1198 = vpop.xlane.xlu0 %1197
        %v1199 = vsel %vm1144, %v1182, 0.0
        %1200 = vadd.xlane.f32.xlu0 %v1199
        %v1201 = vpop.xlane.xlu0 %1200
        %v1202 = vsel %vm1144, %v1184, 0.0
        %1203 = vadd.xlane.f32.xlu0 %v1202
        %v1204 = vpop.xlane.xlu0 %1203
        %v1205 = vsel %vm1144, %v1186, 0.0
        %1206 = vadd.xlane.f32.xlu0 %v1205
        %v1207 = vpop.xlane.xlu0 %1206
        %v1208 = vsel %vm1144, %v1188, 0.0
        %1209 = vadd.xlane.f32.xlu0 %v1208
        %v1210 = vpop.xlane.xlu0 %1209
        %v1211 = vsel %vm1144, %v1190, 0.0
        %1212 = vadd.xlane.f32.xlu0 %v1211
        %v1213 = vpop.xlane.xlu0 %1212
        %v1214 = vsel %vm1144, %v1192, 0.0
        %1215 = vadd.xlane.f32.xlu0 %v1214
        %v1216 = vpop.xlane.xlu0 %1215
        %v1217 = vrcp.pop %v1195
        %v1218 = vrcp.pop %v1198
        %v1219 = vrcp.pop %v1201
        %v1220 = vrcp.pop %v1204
        %v1221 = vrcp.pop %v1207
        %v1222 = vrcp.pop %v1210
        %v1223 = vrcp.pop %v1213
        %v1224 = vrcp.pop %v1216
        %v1225 = vmul.f32 %v1178, %v1217
        %v1226 = vmul.f32 %v1180, %v1218
        %v1227 = vmul.f32 %v1182, %v1219
        %v1228 = vmul.f32 %v1184, %v1220
        %v1229 = vmul.f32 %v1186, %v1221
        %v1230 = vmul.f32 %v1188, %v1222
        %v1231 = vmul.f32 %v1190, %v1223
        %v1232 = vmul.f32 %v1192, %v1224
        %v1233 = vpack.c.bf16 %v1226, %v1225
        %v1234 = vpack.c.bf16 %v1228, %v1227
        %v1235 = vpack.c.bf16 %v1230, %v1229
        %v1236 = vpack.c.bf16 %v1232, %v1231
        %v1238 = vsel %vm1144, %v1233, 0
        %1240 = vmatprep.subr.bf16.mxu0 0
        %1241 = vmatpush1.bf16.msra.mxu0 0
        %1242 = vmatprep.subr.bf16.mxu0 0
        %1243 = vmatpush1.bf16.msra.mxu0 0
        %1244 = vmatprep.subr.bf16.mxu0 0
        %1245 = vmatpush1.bf16.msra.mxu0 0
        %1246 = vmatprep.subr.bf16.mxu0 0
        %1247 = vmatpush1.bf16.msra.mxu0 0
        %1248 = vmatprep.subr.bf16.mxu0 0
        %1249 = vmatpush1.bf16.msra.mxu0 0
        %1250 = vmatprep.subr.bf16.mxu0 0
        %1251 = vmatpush1.bf16.msra.mxu0 0
        %1252 = vmatprep.subr.bf16.mxu0 0
        %1253 = vmatpush1.bf16.msra.mxu0 0
        %1254 = vmatprep.subr.bf16.mxu0 0
        %1255 = vmatpush1.bf16.msra.mxu0 %v922
        %1256 = vmatprep.subr.bf16.mxu0 0
        %1257 = vmatpush2.bf16.msra.mxu0 0
        %1258 = vmatprep.subr.bf16.mxu0 0
        %1259 = vmatpush2.bf16.msra.mxu0 0
        %1260 = vmatprep.subr.bf16.mxu0 0
        %1261 = vmatpush2.bf16.msra.mxu0 0
        %1262 = vmatprep.subr.bf16.mxu0 0
        %1263 = vmatpush2.bf16.msra.mxu0 0
        %1264 = vmatprep.subr.bf16.mxu0 0
        %1265 = vmatpush2.bf16.msra.mxu0 0
        %1266 = vmatprep.subr.bf16.mxu0 0
        %1267 = vmatpush2.bf16.msra.mxu0 0
        %1268 = vmatprep.subr.bf16.mxu0 0
        %1269 = vmatpush2.bf16.msra.mxu0 0
        %1270 = vmatprep.subr.bf16.mxu0 0
        %1271 = vmatpush2.bf16.msra.mxu0 0
        %1272 = vmatprep.mubr.bf16.mxu0 0
        %1273 = vmatmul.mubr.bf16.gmra.mxu0 %v1238
        %v1274 = vpop.f32.mrf.mxu0
        %v1275 = vadd.f32 0.0, %v1274
        %v1276 = vpop.f32.mrf.mxu0
        %v1277 = vpop.f32.mrf.mxu0
        %v1278 = vadd.f32 0.0, %v1277
        %v1279 = vpop.f32.mrf.mxu0
        %1280 = vdwg.mxu0
        %v1282 = vsel %vm1144, %v1234, 0
        %1284 = vmatprep.subr.bf16.mxu0 0
        %1285 = vmatpush1.bf16.msra.mxu0 0
        %1286 = vmatprep.subr.bf16.mxu0 0
        %1287 = vmatpush1.bf16.msra.mxu0 0
        %1288 = vmatprep.subr.bf16.mxu0 0
        %1289 = vmatpush1.bf16.msra.mxu0 0
        %1290 = vmatprep.subr.bf16.mxu0 0
        %1291 = vmatpush1.bf16.msra.mxu0 0
        %1292 = vmatprep.subr.bf16.mxu0 0
        %1293 = vmatpush1.bf16.msra.mxu0 0
        %1294 = vmatprep.subr.bf16.mxu0 0
        %1295 = vmatpush1.bf16.msra.mxu0 0
        %1296 = vmatprep.subr.bf16.mxu0 0
        %1297 = vmatpush1.bf16.msra.mxu0 0
        %1298 = vmatprep.subr.bf16.mxu0 0
        %1299 = vmatpush1.bf16.msra.mxu0 %v926
        %1300 = vmatprep.subr.bf16.mxu0 0
        %1301 = vmatpush2.bf16.msra.mxu0 0
        %1302 = vmatprep.subr.bf16.mxu0 0
        %1303 = vmatpush2.bf16.msra.mxu0 0
        %1304 = vmatprep.subr.bf16.mxu0 0
        %1305 = vmatpush2.bf16.msra.mxu0 0
        %1306 = vmatprep.subr.bf16.mxu0 0
        %1307 = vmatpush2.bf16.msra.mxu0 0
        %1308 = vmatprep.subr.bf16.mxu0 0
        %1309 = vmatpush2.bf16.msra.mxu0 0
        %1310 = vmatprep.subr.bf16.mxu0 0
        %1311 = vmatpush2.bf16.msra.mxu0 0
        %1312 = vmatprep.subr.bf16.mxu0 0
        %1313 = vmatpush2.bf16.msra.mxu0 0
        %1314 = vmatprep.subr.bf16.mxu0 0
        %1315 = vmatpush2.bf16.msra.mxu0 0
        %1316 = vmatprep.mubr.bf16.mxu0 0
        %1317 = vmatmul.mubr.bf16.gmra.mxu0 %v1282
        %v1318 = vpop.f32.mrf.mxu0
        %v1319 = vadd.f32 0.0, %v1318
        %v1320 = vpop.f32.mrf.mxu0
        %v1321 = vpop.f32.mrf.mxu0
        %v1322 = vadd.f32 0.0, %v1321
        %v1323 = vpop.f32.mrf.mxu0
        %1324 = vdwg.mxu0
        %v1326 = vsel %vm1144, %v1235, 0
        %1328 = vmatprep.subr.bf16.mxu0 0
        %1329 = vmatpush1.bf16.msra.mxu0 0
        %1330 = vmatprep.subr.bf16.mxu0 0
        %1331 = vmatpush1.bf16.msra.mxu0 0
        %1332 = vmatprep.subr.bf16.mxu0 0
        %1333 = vmatpush1.bf16.msra.mxu0 0
        %1334 = vmatprep.subr.bf16.mxu0 0
        %1335 = vmatpush1.bf16.msra.mxu0 0
        %1336 = vmatprep.subr.bf16.mxu0 0
        %1337 = vmatpush1.bf16.msra.mxu0 0
        %1338 = vmatprep.subr.bf16.mxu0 0
        %1339 = vmatpush1.bf16.msra.mxu0 0
        %1340 = vmatprep.subr.bf16.mxu0 0
        %1341 = vmatpush1.bf16.msra.mxu0 0
        %1342 = vmatprep.subr.bf16.mxu0 0
        %1343 = vmatpush1.bf16.msra.mxu0 %v930
        %1344 = vmatprep.subr.bf16.mxu0 0
        %1345 = vmatpush2.bf16.msra.mxu0 0
        %1346 = vmatprep.subr.bf16.mxu0 0
        %1347 = vmatpush2.bf16.msra.mxu0 0
        %1348 = vmatprep.subr.bf16.mxu0 0
        %1349 = vmatpush2.bf16.msra.mxu0 0
        %1350 = vmatprep.subr.bf16.mxu0 0
        %1351 = vmatpush2.bf16.msra.mxu0 0
        %1352 = vmatprep.subr.bf16.mxu0 0
        %1353 = vmatpush2.bf16.msra.mxu0 0
        %1354 = vmatprep.subr.bf16.mxu0 0
        %1355 = vmatpush2.bf16.msra.mxu0 0
        %1356 = vmatprep.subr.bf16.mxu0 0
        %1357 = vmatpush2.bf16.msra.mxu0 0
        %1358 = vmatprep.subr.bf16.mxu0 0
        %1359 = vmatpush2.bf16.msra.mxu0 0
        %1360 = vmatprep.mubr.bf16.mxu0 0
        %1361 = vmatmul.mubr.bf16.gmra.mxu0 %v1326
        %v1362 = vpop.f32.mrf.mxu0
        %v1363 = vadd.f32 0.0, %v1362
        %v1364 = vpop.f32.mrf.mxu0
        %v1365 = vpop.f32.mrf.mxu0
        %v1366 = vadd.f32 0.0, %v1365
        %v1367 = vpop.f32.mrf.mxu0
        %1368 = vdwg.mxu0
        %v1370 = vsel %vm1144, %v1236, 0
        %1372 = vmatprep.subr.bf16.mxu0 0
        %1373 = vmatpush1.bf16.msra.mxu0 0
        %1374 = vmatprep.subr.bf16.mxu0 0
        %1375 = vmatpush1.bf16.msra.mxu0 0
        %1376 = vmatprep.subr.bf16.mxu0 0
        %1377 = vmatpush1.bf16.msra.mxu0 0
        %1378 = vmatprep.subr.bf16.mxu0 0
        %1379 = vmatpush1.bf16.msra.mxu0 0
        %1380 = vmatprep.subr.bf16.mxu0 0
        %1381 = vmatpush1.bf16.msra.mxu0 0
        %1382 = vmatprep.subr.bf16.mxu0 0
        %1383 = vmatpush1.bf16.msra.mxu0 0
        %1384 = vmatprep.subr.bf16.mxu0 0
        %1385 = vmatpush1.bf16.msra.mxu0 0
        %1386 = vmatprep.subr.bf16.mxu0 0
        %1387 = vmatpush1.bf16.msra.mxu0 %v934
        %1388 = vmatprep.subr.bf16.mxu0 0
        %1389 = vmatpush2.bf16.msra.mxu0 0
        %1390 = vmatprep.subr.bf16.mxu0 0
        %1391 = vmatpush2.bf16.msra.mxu0 0
        %1392 = vmatprep.subr.bf16.mxu0 0
        %1393 = vmatpush2.bf16.msra.mxu0 0
        %1394 = vmatprep.subr.bf16.mxu0 0
        %1395 = vmatpush2.bf16.msra.mxu0 0
        %1396 = vmatprep.subr.bf16.mxu0 0
        %1397 = vmatpush2.bf16.msra.mxu0 0
        %1398 = vmatprep.subr.bf16.mxu0 0
        %1399 = vmatpush2.bf16.msra.mxu0 0
        %1400 = vmatprep.subr.bf16.mxu0 0
        %1401 = vmatpush2.bf16.msra.mxu0 0
        %1402 = vmatprep.subr.bf16.mxu0 0
        %1403 = vmatpush2.bf16.msra.mxu0 0
        %1404 = vmatprep.mubr.bf16.mxu0 0
        %1405 = vmatmul.mubr.bf16.gmra.mxu0 %v1370
        %v1406 = vpop.f32.mrf.mxu0
        %v1407 = vadd.f32 0.0, %v1406
        %v1408 = vpop.f32.mrf.mxu0
        %v1409 = vpop.f32.mrf.mxu0
        %v1410 = vadd.f32 0.0, %v1409
        %v1411 = vpop.f32.mrf.mxu0
        %1412 = vdwg.mxu0
        %v1413 = vcombine.low %v1275, %v1363
        %v1414 = vcombine.high %v1275, %v1363
        %v1416 = vunpack.c.l.s4 1983009808
        %v1417 = vunpack.c.0.s8 %v1416
        %v1418 = vlaneseq
        %v1419 = vshrl.u32 %v1418, 7
        %v1420 = vsub.s32 %v1417, %v1419
        %v1421 = vrot.slane %v1413, %v1420
        %v1423 = vunpack.c.l.s4 1983009808
        %v1424 = vunpack.c.0.s8 %v1423
        %v1425 = vlaneseq
        %v1426 = vshrl.u32 %v1425, 7
        %v1427 = vsub.s32 %v1424, %v1426
        %v1428 = vrot.slane %v1414, %v1427
        %v1429 = vcombine.low %v1319, %v1407
        %v1430 = vcombine.high %v1319, %v1407
        %v1432 = vunpack.c.l.s4 1983009808
        %v1433 = vunpack.c.0.s8 %v1432
        %v1434 = vlaneseq
        %v1435 = vshrl.u32 %v1434, 7
        %v1436 = vsub.s32 %v1433, %v1435
        %v1437 = vrot.slane %v1429, %v1436
        %v1439 = vunpack.c.l.s4 1983009808
        %v1440 = vunpack.c.0.s8 %v1439
        %v1441 = vlaneseq
        %v1442 = vshrl.u32 %v1441, 7
        %v1443 = vsub.s32 %v1440, %v1442
        %v1444 = vrot.slane %v1430, %v1443
        %v1445 = vcombine.low %v1421, %v1437
        %v1446 = vcombine.high %v1421, %v1437
        %v1448 = vunpack.c.l.s4 1934713408
        %v1449 = vunpack.c.0.s8 %v1448
        %v1450 = vlaneseq
        %v1451 = vshrl.u32 %v1450, 7
        %v1452 = vsub.s32 %v1449, %v1451
        %v1453 = vrot.slane %v1445, %v1452
        %v1455 = vunpack.c.l.s4 1934713408
        %v1456 = vunpack.c.0.s8 %v1455
        %v1457 = vlaneseq
        %v1458 = vshrl.u32 %v1457, 7
        %v1459 = vsub.s32 %v1456, %v1458
        %v1460 = vrot.slane %v1446, %v1459
        %v1461 = vcombine.low %v1428, %v1444
        %v1462 = vcombine.high %v1428, %v1444
        %v1464 = vunpack.c.l.s4 1934713408
        %v1465 = vunpack.c.0.s8 %v1464
        %v1466 = vlaneseq
        %v1467 = vshrl.u32 %v1466, 7
        %v1468 = vsub.s32 %v1465, %v1467
        %v1469 = vrot.slane %v1461, %v1468
        %v1471 = vunpack.c.l.s4 1934713408
        %v1472 = vunpack.c.0.s8 %v1471
        %v1473 = vlaneseq
        %v1474 = vshrl.u32 %v1473, 7
        %v1475 = vsub.s32 %v1472, %v1474
        %v1476 = vrot.slane %v1462, %v1475
        %v1477 = vcombine.high %v1453, 0.0
        %v1478 = vcombine.high %v1460, 0.0
        %v1479 = vcombine.high %v1469, 0.0
        %v1480 = vcombine.high %v1476, 0.0
        %v1481 = vcombine.low %v1278, %v1366
        %v1482 = vcombine.high %v1278, %v1366
        %v1484 = vunpack.c.l.s4 1983009808
        %v1485 = vunpack.c.0.s8 %v1484
        %v1486 = vlaneseq
        %v1487 = vshrl.u32 %v1486, 7
        %v1488 = vsub.s32 %v1485, %v1487
        %v1489 = vrot.slane %v1481, %v1488
        %v1491 = vunpack.c.l.s4 1983009808
        %v1492 = vunpack.c.0.s8 %v1491
        %v1493 = vlaneseq
        %v1494 = vshrl.u32 %v1493, 7
        %v1495 = vsub.s32 %v1492, %v1494
        %v1496 = vrot.slane %v1482, %v1495
        %v1497 = vcombine.low %v1322, %v1410
        %v1498 = vcombine.high %v1322, %v1410
        %v1500 = vunpack.c.l.s4 1983009808
        %v1501 = vunpack.c.0.s8 %v1500
        %v1502 = vlaneseq
        %v1503 = vshrl.u32 %v1502, 7
        %v1504 = vsub.s32 %v1501, %v1503
        %v1505 = vrot.slane %v1497, %v1504
        %v1507 = vunpack.c.l.s4 1983009808
        %v1508 = vunpack.c.0.s8 %v1507
        %v1509 = vlaneseq
        %v1510 = vshrl.u32 %v1509, 7
        %v1511 = vsub.s32 %v1508, %v1510
        %v1512 = vrot.slane %v1498, %v1511
        %v1513 = vcombine.low %v1489, %v1505
        %v1514 = vcombine.high %v1489, %v1505
        %v1516 = vunpack.c.l.s4 1934713408
        %v1517 = vunpack.c.0.s8 %v1516
        %v1518 = vlaneseq
        %v1519 = vshrl.u32 %v1518, 7
        %v1520 = vsub.s32 %v1517, %v1519
        %v1521 = vrot.slane %v1513, %v1520
        %v1523 = vunpack.c.l.s4 1934713408
        %v1524 = vunpack.c.0.s8 %v1523
        %v1525 = vlaneseq
        %v1526 = vshrl.u32 %v1525, 7
        %v1527 = vsub.s32 %v1524, %v1526
        %v1528 = vrot.slane %v1514, %v1527
        %v1529 = vcombine.low %v1496, %v1512
        %v1530 = vcombine.high %v1496, %v1512
        %v1532 = vunpack.c.l.s4 1934713408
        %v1533 = vunpack.c.0.s8 %v1532
        %v1534 = vlaneseq
        %v1535 = vshrl.u32 %v1534, 7
        %v1536 = vsub.s32 %v1533, %v1535
        %v1537 = vrot.slane %v1529, %v1536
        %v1539 = vunpack.c.l.s4 1934713408
        %v1540 = vunpack.c.0.s8 %v1539
        %v1541 = vlaneseq
        %v1542 = vshrl.u32 %v1541, 7
        %v1543 = vsub.s32 %v1540, %v1542
        %v1544 = vrot.slane %v1530, %v1543
        %v1545 = vcombine.high %v1521, 0.0
        %v1546 = vcombine.high %v1528, 0.0
        %v1547 = vcombine.high %v1537, 0.0
        %v1548 = vcombine.high %v1544, 0.0
        %v1549 = vcombine.low %v1453, %v1460
        %v1551 = vunpack.c.l.s4 1983009808
        %v1552 = vunpack.c.0.s8 %v1551
        %v1553 = vlaneseq
        %v1554 = vshrl.u32 %v1553, 7
        %v1555 = vsub.s32 %v1552, %v1554
        %v1556 = vrot.slane %v1549, %v1555
        %v1557 = vcombine.low %v1477, %v1478
        %v1559 = vunpack.c.l.s4 1983009808
        %v1560 = vunpack.c.0.s8 %v1559
        %v1561 = vlaneseq
        %v1562 = vshrl.u32 %v1561, 7
        %v1563 = vsub.s32 %v1560, %v1562
        %v1564 = vrot.slane %v1557, %v1563
        %v1565 = vcombine.low %v1469, %v1476
        %v1567 = vunpack.c.l.s4 1983009808
        %v1568 = vunpack.c.0.s8 %v1567
        %v1569 = vlaneseq
        %v1570 = vshrl.u32 %v1569, 7
        %v1571 = vsub.s32 %v1568, %v1570
        %v1572 = vrot.slane %v1565, %v1571
        %v1573 = vcombine.low %v1479, %v1480
        %v1575 = vunpack.c.l.s4 1983009808
        %v1576 = vunpack.c.0.s8 %v1575
        %v1577 = vlaneseq
        %v1578 = vshrl.u32 %v1577, 7
        %v1579 = vsub.s32 %v1576, %v1578
        %v1580 = vrot.slane %v1573, %v1579
        %v1581 = vcombine.low %v1556, %v1564
        %v1582 = vcombine.high %v1556, %v1564
        %v1584 = vunpack.c.l.s4 1934713408
        %v1585 = vunpack.c.0.s8 %v1584
        %v1586 = vlaneseq
        %v1587 = vshrl.u32 %v1586, 7
        %v1588 = vsub.s32 %v1585, %v1587
        %v1589 = vrot.slane %v1581, %v1588
        %v1591 = vunpack.c.l.s4 1934713408
        %v1592 = vunpack.c.0.s8 %v1591
        %v1593 = vlaneseq
        %v1594 = vshrl.u32 %v1593, 7
        %v1595 = vsub.s32 %v1592, %v1594
        %v1596 = vrot.slane %v1582, %v1595
        %v1597 = vcombine.low %v1572, %v1580
        %v1598 = vcombine.high %v1572, %v1580
        %v1600 = vunpack.c.l.s4 1934713408
        %v1601 = vunpack.c.0.s8 %v1600
        %v1602 = vlaneseq
        %v1603 = vshrl.u32 %v1602, 7
        %v1604 = vsub.s32 %v1601, %v1603
        %v1605 = vrot.slane %v1597, %v1604
        %v1607 = vunpack.c.l.s4 1934713408
        %v1608 = vunpack.c.0.s8 %v1607
        %v1609 = vlaneseq
        %v1610 = vshrl.u32 %v1609, 7
        %v1611 = vsub.s32 %v1608, %v1610
        %v1612 = vrot.slane %v1598, %v1611
        %v1613 = vcombine.low %v1589, %v1605
        %v1614 = vcombine.high %v1589, %v1605
        %v1615 = vcombine.low %v1596, %v1612
        %v1616 = vcombine.high %v1596, %v1612
        %v1617 = vcombine.low %v1521, %v1528
        %v1619 = vunpack.c.l.s4 1983009808
        %v1620 = vunpack.c.0.s8 %v1619
        %v1621 = vlaneseq
        %v1622 = vshrl.u32 %v1621, 7
        %v1623 = vsub.s32 %v1620, %v1622
        %v1624 = vrot.slane %v1617, %v1623
        %v1625 = vcombine.low %v1545, %v1546
        %v1627 = vunpack.c.l.s4 1983009808
        %v1628 = vunpack.c.0.s8 %v1627
        %v1629 = vlaneseq
        %v1630 = vshrl.u32 %v1629, 7
        %v1631 = vsub.s32 %v1628, %v1630
        %v1632 = vrot.slane %v1625, %v1631
        %v1633 = vcombine.low %v1537, %v1544
        %v1635 = vunpack.c.l.s4 1983009808
        %v1636 = vunpack.c.0.s8 %v1635
        %v1637 = vlaneseq
        %v1638 = vshrl.u32 %v1637, 7
        %v1639 = vsub.s32 %v1636, %v1638
        %v1640 = vrot.slane %v1633, %v1639
        %v1641 = vcombine.low %v1547, %v1548
        %v1643 = vunpack.c.l.s4 1983009808
        %v1644 = vunpack.c.0.s8 %v1643
        %v1645 = vlaneseq
        %v1646 = vshrl.u32 %v1645, 7
        %v1647 = vsub.s32 %v1644, %v1646
        %v1648 = vrot.slane %v1641, %v1647
        %v1649 = vcombine.low %v1624, %v1632
        %v1650 = vcombine.high %v1624, %v1632
        %v1652 = vunpack.c.l.s4 1934713408
        %v1653 = vunpack.c.0.s8 %v1652
        %v1654 = vlaneseq
        %v1655 = vshrl.u32 %v1654, 7
        %v1656 = vsub.s32 %v1653, %v1655
        %v1657 = vrot.slane %v1649, %v1656
        %v1659 = vunpack.c.l.s4 1934713408
        %v1660 = vunpack.c.0.s8 %v1659
        %v1661 = vlaneseq
        %v1662 = vshrl.u32 %v1661, 7
        %v1663 = vsub.s32 %v1660, %v1662
        %v1664 = vrot.slane %v1650, %v1663
        %v1665 = vcombine.low %v1640, %v1648
        %v1666 = vcombine.high %v1640, %v1648
        %v1668 = vunpack.c.l.s4 1934713408
        %v1669 = vunpack.c.0.s8 %v1668
        %v1670 = vlaneseq
        %v1671 = vshrl.u32 %v1670, 7
        %v1672 = vsub.s32 %v1669, %v1671
        %v1673 = vrot.slane %v1665, %v1672
        %v1675 = vunpack.c.l.s4 1934713408
        %v1676 = vunpack.c.0.s8 %v1675
        %v1677 = vlaneseq
        %v1678 = vshrl.u32 %v1677, 7
        %v1679 = vsub.s32 %v1676, %v1678
        %v1680 = vrot.slane %v1666, %v1679
        %v1681 = vcombine.low %v1657, %v1673
        %v1682 = vcombine.high %v1657, %v1673
        %v1683 = vcombine.low %v1664, %v1680
        %v1684 = vcombine.high %v1664, %v1680
        %1687 = vrot.lane.b32.xlu0 %v1614, 8
        %v1688 = vpop.permute.xlu0 %1687
        %1689 = vrot.lane.b32.xlu0 %v1682, 8
        %v1690 = vpop.permute.xlu0 %1689
        %1695 = vrot.lane.b32.xlu0 %v1615, 16
        %v1696 = vpop.permute.xlu0 %1695
        %1697 = vrot.lane.b32.xlu0 %v1683, 16
        %v1698 = vpop.permute.xlu0 %1697
        %1703 = vrot.lane.b32.xlu0 %v1616, 24
        %v1704 = vpop.permute.xlu0 %1703
        %1705 = vrot.lane.b32.xlu0 %v1684, 24
        %v1706 = vpop.permute.xlu0 %1705
        %v1709 = vsel %vm936, %v1613, %v1688
        %v1710 = vsel %vm936, %v1681, %v1690
        %v1711 = vsel %vm1144, %v1709, %v1696
        %v1712 = vsel %vm1144, %v1710, %v1698
        %vm1713 = vcmask 195584
        %v1714 = vsel %vm1713, %v1711, %v1704
        %v1715 = vsel %vm1713, %v1712, %v1706
        %v1716 = vpack.c.bf16 %v1715, %v1714
        %v1717 = vld [vmem:[#allocation7] sm:$0xf]
        %v1718 = vld [vmem:[#allocation7 + $0x4] sm:$0xf]
        %v1719 = vld [vmem:[#allocation7 + $0x8] sm:$0xf]
        %v1720 = vld [vmem:[#allocation7 + $0xc] sm:$0xf]
        %v1721 = vld [vmem:[%s3] sm:$0x1]
        %v1723 = vlaneseq
        %v1724 = vshrl.u32 %v1723, 7
        %v1725 = vsub.s32 0, %v1724
        %v1726 = vrot.slane %v1721, %v1725
        %v1732 = vunpack.c.l.b16 %v1717
        %v1733 = vunpack.c.l.b16 %v1718
        %v1734 = vunpack.c.l.b16 %v1719
        %v1735 = vunpack.c.l.b16 %v1720
        %v1736 = vpack.c.b16 %v1733, %v1732
        %v1737 = vpack.c.b16 %v1735, %v1734
        %v1741 = vsel %vm269, %v1716, 0
        %1743 = vmatprep.subr.bf16.mxu0 0
        %1744 = vmatpush1.bf16.msra.mxu0 0
        %1745 = vmatprep.subr.bf16.mxu0 0
        %1746 = vmatpush1.bf16.msra.mxu0 0
        %1747 = vmatprep.subr.bf16.mxu0 0
        %1748 = vmatpush1.bf16.msra.mxu0 0
        %1749 = vmatprep.subr.bf16.mxu0 0
        %1750 = vmatpush1.bf16.msra.mxu0 0
        %1751 = vmatprep.subr.bf16.mxu0 0
        %1752 = vmatpush1.bf16.msra.mxu0 0
        %1753 = vmatprep.subr.bf16.mxu0 0
        %1754 = vmatpush1.bf16.msra.mxu0 0
        %1755 = vmatprep.subr.bf16.mxu0 0
        %1756 = vmatpush1.bf16.msra.mxu0 %v1737
        %1757 = vmatprep.subr.bf16.mxu0 0
        %1758 = vmatpush1.bf16.msra.mxu0 %v1736
        %1759 = vmatprep.subr.bf16.mxu0 0
        %1760 = vmatpush2.bf16.msra.mxu0 0
        %1761 = vmatprep.subr.bf16.mxu0 0
        %1762 = vmatpush2.bf16.msra.mxu0 0
        %1763 = vmatprep.subr.bf16.mxu0 0
        %1764 = vmatpush2.bf16.msra.mxu0 0
        %1765 = vmatprep.subr.bf16.mxu0 0
        %1766 = vmatpush2.bf16.msra.mxu0 0
        %1767 = vmatprep.subr.bf16.mxu0 0
        %1768 = vmatpush2.bf16.msra.mxu0 0
        %1769 = vmatprep.subr.bf16.mxu0 0
        %1770 = vmatpush2.bf16.msra.mxu0 0
        %1771 = vmatprep.subr.bf16.mxu0 0
        %1772 = vmatpush2.bf16.msra.mxu0 0
        %1773 = vmatprep.subr.bf16.mxu0 0
        %1774 = vmatpush2.bf16.msra.mxu0 0
        %1775 = vmatprep.mubr.bf16.mxu0 0
        %1776 = vmatmul.mubr.bf16.gmra.mxu0 %v1741
        %v1777 = vpop.f32.mrf.mxu0
        %v1778 = vadd.f32 %v1726, %v1777
        %v1779 = vpop.f32.mrf.mxu0
        %v1780 = vpop.f32.mrf.mxu0
        %v1781 = vadd.f32 %v1726, %v1780
        %v1782 = vpop.f32.mrf.mxu0
        %1783 = vdwg.mxu0
        %1784 = vst [vmem:[%s244] sm:$0xff] %v1778
        %1785 = vst [vmem:[%s244 + $0x8] sm:$0xff] %v1781
        %s1786 = sand.u32 %s119, 1
        %s1787 = scalar_lea.sflag [#allocation4], %s1786
        %s1788 = sand.u32 %s119, 1
        %s1789 = smul.addr %s1788, 16
        %s1790 = scalar_lea.vmem [#allocation8], %s1789
        // Predicated region
        $region49: #{tpu_custom_call.1} parent=35 // pred_check
          %p1791 = pneg %p129
        $region50: #{tpu_custom_call.1} parent=35 // pred_check_branch
          %1793 = sbr.rel (%p1791) target = $region52
        $region51: #{tpu_custom_call.1} parent=35 // pred_region
          %s1795 = ssub.s32 256, 256
          %1796 = vsyncadd %s1787, %s1795
          %s1797 = smul.addr %s22, 2
          %s1798 = smul.addr %s1797, 128
          %s1799 = scalar_lea.hbm %s4, %s1798
          %s1800 = sshll.u32 %s1790, 4
          %s1801 = int_to_ptr.vmem [resolvable:$true] %s1800
          %1806 = dma.vmem_to_hbm [thread:$0]  %s1801, 256, %s1799, %s1787, 128, 128, 8
        $region52: #{tpu_custom_call.1} parent=35 // pred_fallthru
          _
      $region36: #{tpu_custom_call.1} parent=5 // pred_fallthru
        _
      %p1807 = scmp.le.s32.totalorder 2, %s17
      // Predicated region
      $region53: #{tpu_custom_call.1} parent=5 // pred_check
        %p1808 = pneg %p1807
      $region54: #{tpu_custom_call.1} parent=5 // pred_check_branch
        %1810 = sbr.rel (%p1808) target = $region56
      $region55: #{tpu_custom_call.1} parent=5 // pred_region
        %s1811 = ssub.s32 %s17, 2
        // Predicated region
        $region57: #{tpu_custom_call.1} parent=55 // pred_check
          %p1812 = pneg %p135
        $region58: #{tpu_custom_call.1} parent=55 // pred_check_branch
          %1814 = sbr.rel (%p1812) target = $region60
        $region59: #{tpu_custom_call.1} parent=55 // pred_region
          %s1815 = sand.u32 %s120, 1
          %s1816 = scalar_lea.sflag [#allocation4], %s1815
          %s1817 = sand.u32 %s120, 1
          %s1818 = smul.addr %s1817, 16
          %s1819 = scalar_lea.vmem [#allocation8], %s1818
          %1820 = dma.done %s1816, 256
        $region60: #{tpu_custom_call.1} parent=55 // pred_fallthru
          _
      $region56: #{tpu_custom_call.1} parent=5 // pred_fallthru
        _
    $region6: #{tpu_custom_call.1} parent=1 // loop_footer
      %s21 = sadd.s32 1, %s17
    $region7: #{tpu_custom_call.1} parent=1 // loop_footer_branch
      %16 = sbr.rel target = $region3
    $region8: #{tpu_custom_call.1} parent=1 // loop_exit
      _
    %1821 = vsyncpa [#allocation3], 1
    %s1822 = scalar_lea.sflag [#allocation3], 1
    %1823 = vsyncpa %s1822, 1
    %1824 = vsyncpa [#allocation6], 1
    %1825 = vsyncpa [#allocation4], 1
    %s1826 = scalar_lea.sflag [#allocation4], 1
    %1827 = vsyncpa %s1826, 1

</llo_original>
